<compile_context>
chip_gen: v5e
topology: v5e:2x2
jax: 0.10.0
libtpu: 0.0.40
codegen_flags: <defaults>
</compile_context>

<pallas_src>
import jax
import jax.numpy as jnp
from jax import lax
from jax.experimental import pallas as pl
from jax.experimental.pallas import tpu as pltpu


def make_mha_kernel(num_heads, head_dim, d_out, tq, num_q_tiles, compute_dtype):
    scale = 1.0 / (head_dim ** 0.5)
    NEG = -1e30  # finite mask fill (tiling-safe, no inf - inf NaNs)

    def mha_kernel(x_ref, wq_ref, wkv_ref, wo_ref, bo_ref, o_ref,
                   k_sc, v_sc, q_sc, m_sc, l_sc, acc_sc):
        qi = pl.program_id(1)
        cdt = compute_dtype

        # ---- K/V projection: ONCE per batch element (qi == 0), into persistent
        # VMEM scratch in (H, T, hd) layout.  Chunked over rows so the f32
        # intermediate stays O(tq * 2*d_out) instead of O(T * 2*d_out).
        @pl.when(qi == 0)
        def _():
            w_kv = wkv_ref[...].astype(cdt)                       # (d_in, 2*d_out)

            @pl.loop(0, num_q_tiles)
            def _(t):
                r0 = pl.multiple_of(t * tq, tq)
                xc = x_ref[pl.ds(r0, tq), :].astype(cdt)          # (tq, d_in)
                kvc = jnp.dot(xc, w_kv, preferred_element_type=jnp.float32)
                # Store per-head so the kv loop below uses head-batched matmuls
                # with no per-step relayout (cheap slice stores, once per b).
                for h in range(num_heads):
                    ks = kvc[:, h * head_dim:(h + 1) * head_dim]
                    vs = kvc[:, d_out + h * head_dim:d_out + (h + 1) * head_dim]
                    k_sc[h, pl.ds(r0, tq), :] = ks.astype(cdt)
                    v_sc[h, pl.ds(r0, tq), :] = vs.astype(cdt)

        # ---- Q projection for this q-tile only; 1/sqrt(hd) folded into q once.
        q0 = pl.multiple_of(qi * tq, tq)
        xq = x_ref[pl.ds(q0, tq), :].astype(cdt)                  # (tq, d_in)
        q = jnp.dot(xq, wq_ref[...].astype(cdt),
                    preferred_element_type=jnp.float32) * scale   # (tq, d_out) f32
        for h in range(num_heads):
            q_sc[h] = q[:, h * head_dim:(h + 1) * head_dim].astype(cdt)
        q3 = q_sc[...]                                            # (H, tq, hd)

        # ---- online-softmax state
        m_sc[...] = jnp.full_like(m_sc, NEG)
        l_sc[...] = jnp.zeros_like(l_sc)
        acc_sc[...] = jnp.zeros_like(acc_sc)

        # Causal mask pieces: (tq, 1) row iota vs (1, tkv) col iota.
        row = qi * tq + lax.broadcasted_iota(jnp.int32, (tq, 1), 0)

        # ---- flash-style loop over kv blocks.  Causality => only blocks
        # j <= qi contain unmasked keys, so the trip count is qi + 1
        # (causal block skipping; tkv == tq).
        @pl.loop(0, qi + 1)
        def _(j):
            c0 = pl.multiple_of(j * tq, tq)
            kh = k_sc[:, pl.ds(c0, tq), :]                        # (H, tkv, hd)
            vh = v_sc[:, pl.ds(c0, tq), :]

            s = jnp.einsum('hqd,hkd->hqk', q3, kh,
                           preferred_element_type=jnp.float32)    # (H, tq, tkv)
            col = c0 + lax.broadcasted_iota(jnp.int32, (1, tq), 1)
            keep = col <= row                                     # (tq, tkv)
            s = jnp.where(keep, s, NEG)

            m_prev = m_sc[...]
            m_new = jnp.maximum(m_prev, jnp.max(s, axis=-1, keepdims=True))
            alpha = jnp.exp(m_prev - m_new)
            p = jnp.exp(s - m_new)
            # TODO(synk): dropout on attention weights omitted (p = 0.0 / inference).
            l_sc[...] = alpha * l_sc[...] + jnp.sum(p, axis=-1, keepdims=True)
            acc_sc[...] = alpha * acc_sc[...] + jnp.einsum(
                'hqk,hkd->hqd', p.astype(cdt), vh,
                preferred_element_type=jnp.float32)
            m_sc[...] = m_new

        # ---- finalize: deferred normalization (EUP reciprocal), merge heads,
        # then ONE full-contraction output projection + bias.
        ctx = acc_sc[...] * pl.reciprocal(l_sc[...], approx=True)  # (H, tq, hd)
        ctx_rows = jnp.concatenate(
            [ctx[h] for h in range(num_heads)], axis=-1).astype(cdt)  # (tq, d_out)
        out = jnp.dot(ctx_rows, wo_ref[...].astype(cdt),
                      preferred_element_type=jnp.float32) + bo_ref[...]
        o_ref[...] = out.astype(o_ref.dtype)

    return mha_kernel


def _vmem_capacity_bytes():
    try:
        return int(pltpu.get_tpu_info().vmem_capacity_bytes)
    except Exception:
        return 64 * 1024 * 1024  # v7x-conservative default


def _round_up(x, m):
    return (x + m - 1) // m * m


def multi_head_attention(x, wq, wk, wv, wo, bo, *, num_heads, compute_dtype=None):
    """Causal MHA forward.  x: (B,T,d_in); wq/wk/wv: (d_in,d_out); wo: (d_out,d_out);
    bo: (1,d_out) or (d_out,).  compute_dtype: dtype fed to the MXU (e.g. bf16)."""
    B, T, d_in = x.shape
    d_out = wq.shape[1]
    assert d_out % num_heads == 0
    head_dim = d_out // num_heads
    cdt = jnp.dtype(compute_dtype) if compute_dtype is not None else jnp.dtype(x.dtype)

    vmem_cap = _vmem_capacity_bytes()
    big_vmem = vmem_cap >= 100 * 1024 * 1024   # v5e/v6e (128 MiB) vs v7x (64 MiB)

    # Tile size: largest tile whose (H, tq, tq) f32 score/weight blocks fit a
    # fraction of VMEM; single tile for short sequences (amortizes the
    # ~0.35us per-grid-step overhead).  Bigger tiles on 128-MiB parts.
    score_budget = vmem_cap // 4
    tq_cap = 512 if big_vmem else 256
    while tq_cap > 64 and 2 * num_heads * tq_cap * tq_cap * 4 > score_budget:
        tq_cap //= 2
    if T <= tq_cap:
        tq = T
    else:
        tq = tq_cap
        while T % tq != 0 and tq > 8:
            tq //= 2
    assert T % tq == 0, "TODO(synk): ragged / non-power-of-two sequence lengths"
    num_q_tiles = T // tq

    bo2 = bo.reshape(1, d_out)
    w_kv = jnp.concatenate([wk, wv], axis=1)   # fused (d_in, 2*d_out) K+V weight

    kernel = make_mha_kernel(num_heads, head_dim, d_out, tq, num_q_tiles, cdt)

    # VMEM budget estimate (blocks + scratch + main transients), with headroom.
    x_size = jnp.dtype(x.dtype).itemsize
    c_size = cdt.itemsize
    hd_pad = _round_up(head_dim, 128)
    t_pad = _round_up(T, 8)
    est = (
        2 * T * d_in * x_size                                    # x block (2 bufs)
        + 2 * tq * d_out * x_size                                # out block (2 bufs)
        + (d_in * d_out + d_in * 2 * d_out + d_out * d_out + 2 * 128) * x_size
        + 2 * num_heads * t_pad * hd_pad * c_size                # k_sc + v_sc
        + num_heads * tq * hd_pad * (c_size + 4)                 # q_sc + acc_sc
        + 2 * num_heads * tq * 128 * 4                           # m_sc + l_sc (padded)
        + 2 * num_heads * tq * tq * 4                            # s / p transients
        + tq * 2 * d_out * 4                                     # kv-proj chunk
    )
    vmem_limit = int(min(max(est * 3 // 2, 32 * 1024 * 1024),
                         (vmem_cap * 9) // 10))

    grid = (B, num_q_tiles)

    def build(single_buffer_consts):
        # Grid-invariant operands: their block index never changes, so the
        # second pipeline buffer is dead VMEM -> single-buffer them.
        const_kw = {"pipeline_mode": pl.Buffered(1)} if single_buffer_consts else {}
        return pl.pallas_call(
            kernel,
            out_shape=jax.ShapeDtypeStruct((B, T, d_out), x.dtype),
            grid_spec=pltpu.PrefetchScalarGridSpec(
                num_scalar_prefetch=0,
                grid=grid,
                in_specs=[
                    # x passed ONCE; q-tile rows sliced out inside the kernel.
                    pl.BlockSpec((None, T, d_in), lambda b, qi: (b, 0, 0)),
                    pl.BlockSpec((d_in, d_out), lambda b, qi: (0, 0), **const_kw),
                    pl.BlockSpec((d_in, 2 * d_out), lambda b, qi: (0, 0), **const_kw),
                    pl.BlockSpec((d_out, d_out), lambda b, qi: (0, 0), **const_kw),
                    pl.BlockSpec((1, d_out), lambda b, qi: (0, 0), **const_kw),
                ],
                out_specs=pl.BlockSpec((None, tq, d_out), lambda b, qi: (b, qi, 0)),
                scratch_shapes=[
                    pltpu.VMEM((num_heads, T, head_dim), cdt),           # K cache
                    pltpu.VMEM((num_heads, T, head_dim), cdt),           # V cache
                    pltpu.VMEM((num_heads, tq, head_dim), cdt),          # Q (tile)
                    pltpu.VMEM((num_heads, tq, 1), jnp.float32),         # running max
                    pltpu.VMEM((num_heads, tq, 1), jnp.float32),         # running sum
                    pltpu.VMEM((num_heads, tq, head_dim), jnp.float32),  # ctx accum
                ],
            ),
            compiler_params=pltpu.CompilerParams(
                # b is megacore-parallel; qi must be "arbitrary" because the
                # K/V scratch written at qi == 0 is reused by later q-tiles.
                dimension_semantics=("parallel", "arbitrary"),
                vmem_limit_bytes=vmem_limit,
            ),
        )

    try:
        return build(True)(x, wq, w_kv, wo, bo2)
    except Exception:
        # Fallback if single-buffered pipeline_mode is unsupported on this jax.
        return build(False)(x, wq, w_kv, wo, bo2)


def reference_mha(x, wq, wk, wv, wo, bo, *, num_heads):
    """Pure-JAX reference mirroring the PyTorch forward (dropout = identity)."""
    B, T, d_in = x.shape
    d_out = wq.shape[1]
    hd = d_out // num_heads
    q = (x @ wq).reshape(B, T, num_heads, hd).transpose(0, 2, 1, 3)
    k = (x @ wk).reshape(B, T, num_heads, hd).transpose(0, 2, 1, 3)
    v = (x @ wv).reshape(B, T, num_heads, hd).transpose(0, 2, 1, 3)
    s = jnp.einsum("bhqd,bhkd->bhqk", q, k)
    mask = jnp.triu(jnp.ones((T, T), dtype=bool), k=1)
    s = jnp.where(mask[None, None], -jnp.inf, s)
    w = jax.nn.softmax(s / (hd ** 0.5), axis=-1)
    ctx = jnp.einsum("bhqk,bhkd->bhqd", w, v).transpose(0, 2, 1, 3)
    ctx = ctx.reshape(B, T, d_out)
    return ctx @ wo + bo


if __name__ == "__main__":
    # Module config: d_in=32, d_out=32, context_length=T=8, dropout=0.0,
    # num_heads=4, qkv_bias=False.
    B, T = 2, 8
    d_in, d_out = 32, 32
    num_heads = 4

    key = jax.random.PRNGKey(0)
    kx, kq, kk, kv, kw, kb = jax.random.split(key, 6)

    x = jax.random.normal(kx, (B, T, d_in), dtype=jnp.float32)
    wq = jax.random.normal(kq, (d_in, d_out), dtype=jnp.float32) * 0.1
    wk = jax.random.normal(kk, (d_in, d_out), dtype=jnp.float32) * 0.1
    wv = jax.random.normal(kv, (d_in, d_out), dtype=jnp.float32) * 0.1
    wo = jax.random.normal(kw, (d_out, d_out), dtype=jnp.float32) * 0.1
    bo = jax.random.normal(kb, (1, d_out), dtype=jnp.float32) * 0.1

    ref = reference_mha(x, wq, wk, wv, wo, bo, num_heads=num_heads)

    # f32 MXU feeds: tight check (only the approx EUP reciprocal adds error).
    out = multi_head_attention(x, wq, wk, wv, wo, bo, num_heads=num_heads)
    out = jax.block_until_ready(out)
    assert out.shape == (B, T, d_out)
    err = float(jnp.max(jnp.abs(out - ref)))
    assert err < 1e-2, f"f32 mismatch vs reference, max abs err = {err}"

    # bf16 MXU feeds (recommended for f32 inputs on v5e/v6e/v7x): looser check.
    out_bf = multi_head_attention(x, wq, wk, wv, wo, bo, num_heads=num_heads,
                                  compute_dtype=jnp.bfloat16)
    out_bf = jax.block_until_ready(out_bf)
    err_bf = float(jnp.max(jnp.abs(out_bf - ref)))
    assert err_bf < 5e-2, f"bf16 mismatch vs reference, max abs err = {err_bf}"

    print("KERNEL_OK")
</pallas_src>

<mosaic_0001>
module attributes {stable_mosaic.version = 11 : i64} {
  func.func @mha_kernel(%arg0: i32, %arg1: i32, %arg2: memref<1x8x32xf32, #tpu.memory_space<vmem>>, %arg3: memref<32x32xf32, #tpu.memory_space<vmem>>, %arg4: memref<32x64xf32, #tpu.memory_space<vmem>>, %arg5: memref<32x32xf32, #tpu.memory_space<vmem>>, %arg6: memref<1x32xf32, #tpu.memory_space<vmem>>, %arg7: memref<1x8x32xf32, #tpu.memory_space<vmem>>, %arg8: memref<4x8x8xf32, #tpu.memory_space<vmem>>, %arg9: memref<4x8x8xf32, #tpu.memory_space<vmem>>, %arg10: memref<4x8x8xf32, #tpu.memory_space<vmem>>, %arg11: memref<4x8x1xf32, #tpu.memory_space<vmem>>, %arg12: memref<4x8x1xf32, #tpu.memory_space<vmem>>, %arg13: memref<4x8x8xf32, #tpu.memory_space<vmem>>) attributes {dimension_semantics = [#tpu.dimension_semantics<parallel>, #tpu.dimension_semantics<arbitrary>], iteration_bounds = array<i64: 2, 1>, scalar_prefetch = 0 : i64, scratch_operands = 6 : i64, tpu.core_type = #tpu.core_type<tc>, window_params = [{transform_indices = @transform_0, window_bounds = array<i64: 1, 8, 32>}, {pipeline_mode = #tpu.pipeline_mode<synchronous>, transform_indices = @transform_1, window_bounds = array<i64: 32, 32>}, {pipeline_mode = #tpu.pipeline_mode<synchronous>, transform_indices = @transform_2, window_bounds = array<i64: 32, 64>}, {pipeline_mode = #tpu.pipeline_mode<synchronous>, transform_indices = @transform_3, window_bounds = array<i64: 32, 32>}, {pipeline_mode = #tpu.pipeline_mode<synchronous>, transform_indices = @transform_4, window_bounds = array<i64: 1, 32>}, {transform_indices = @transform_5, window_bounds = array<i64: 1, 8, 32>}]} {
    %c0_i32 = arith.constant 0 : i32
    %0 = arith.cmpi eq, %arg1, %c0_i32 : i32
    %1 = arith.extui %0 : i1 to i32
    %c0_i32_0 = arith.constant 0 : i32
    %2 = arith.cmpi ne, %1, %c0_i32_0 : i32
    scf.if %2 {
      %c0_52 = arith.constant 0 : index
      %c0_53 = arith.constant 0 : index
      %68 = vector.load %arg4[%c0_52, %c0_53] : memref<32x64xf32, #tpu.memory_space<vmem>>, vector<32x64xf32>
      %c0_i32_54 = arith.constant 0 : i32
      %c1_i32_55 = arith.constant 1 : i32
      %69 = arith.muli %c0_i32_54, %c1_i32_55 : i32
      %c0_i32_56 = arith.constant 0 : i32
      %70 = arith.addi %c0_i32_56, %69 : i32
      %c8_i32_57 = arith.constant 8 : i32
      %71 = arith.muli %70, %c8_i32_57 : i32
      %72 = tpu.assume_multiple %71, 8 : i32
      %c0_58 = arith.constant 0 : index
      %73 = arith.index_cast %72 : i32 to index
      %c0_59 = arith.constant 0 : index
      %74 = vector.load %arg2[%c0_58, %73, %c0_59] : memref<1x8x32xf32, #tpu.memory_space<vmem>>, vector<1x8x32xf32>
      %75 = vector.shape_cast %74 : vector<1x8x32xf32> to vector<8x32xf32>
      %cst_60 = arith.constant dense<0.000000e+00> : vector<8x64xf32>
      %76 = tpu.matmul %75, %68, %cst_60 {dimension_numbers = #tpu.dot_dimension_numbers<[1], [0], [0], [1], [0, 0, 1, 1], [], []>} : vector<8x32xf32>, vector<32x64xf32>, vector<8x64xf32> -> vector<8x64xf32>
      %77 = vector.extract_strided_slice %76 {offsets = [0, 0], sizes = [8, 8], strides = [1, 1]} : vector<8x64xf32> to vector<8x8xf32>
      %78 = vector.extract_strided_slice %76 {offsets = [0, 32], sizes = [8, 8], strides = [1, 1]} : vector<8x64xf32> to vector<8x8xf32>
      %c0_61 = arith.constant 0 : index
      %79 = arith.index_cast %72 : i32 to index
      %c0_62 = arith.constant 0 : index
      %80 = vector.load %arg8[%c0_61, %79, %c0_62] : memref<4x8x8xf32, #tpu.memory_space<vmem>>, vector<1x8x8xf32>
      %81 = vector.shape_cast %80 : vector<1x8x8xf32> to vector<8x8xf32>
      %82 = vector.shape_cast %77 : vector<8x8xf32> to vector<1x8x8xf32>
      tpu.vector_store %arg8[%c0_61, %79, %c0_62], %82 {strides = array<i32>} : memref<4x8x8xf32, #tpu.memory_space<vmem>>, vector<1x8x8xf32>,
      %c0_63 = arith.constant 0 : index
      %83 = arith.index_cast %72 : i32 to index
      %c0_64 = arith.constant 0 : index
      %84 = vector.load %arg9[%c0_63, %83, %c0_64] : memref<4x8x8xf32, #tpu.memory_space<vmem>>, vector<1x8x8xf32>
      %85 = vector.shape_cast %84 : vector<1x8x8xf32> to vector<8x8xf32>
      %86 = vector.shape_cast %78 : vector<8x8xf32> to vector<1x8x8xf32>
      tpu.vector_store %arg9[%c0_63, %83, %c0_64], %86 {strides = array<i32>} : memref<4x8x8xf32, #tpu.memory_space<vmem>>, vector<1x8x8xf32>,
      %87 = vector.extract_strided_slice %76 {offsets = [0, 8], sizes = [8, 8], strides = [1, 1]} : vector<8x64xf32> to vector<8x8xf32>
      %88 = vector.extract_strided_slice %76 {offsets = [0, 40], sizes = [8, 8], strides = [1, 1]} : vector<8x64xf32> to vector<8x8xf32>
      %c1_65 = arith.constant 1 : index
      %89 = arith.index_cast %72 : i32 to index
      %c0_66 = arith.constant 0 : index
      %90 = vector.load %arg8[%c1_65, %89, %c0_66] : memref<4x8x8xf32, #tpu.memory_space<vmem>>, vector<1x8x8xf32>
      %91 = vector.shape_cast %90 : vector<1x8x8xf32> to vector<8x8xf32>
      %92 = vector.shape_cast %87 : vector<8x8xf32> to vector<1x8x8xf32>
      tpu.vector_store %arg8[%c1_65, %89, %c0_66], %92 {strides = array<i32>} : memref<4x8x8xf32, #tpu.memory_space<vmem>>, vector<1x8x8xf32>,
      %c1_67 = arith.constant 1 : index
      %93 = arith.index_cast %72 : i32 to index
      %c0_68 = arith.constant 0 : index
      %94 = vector.load %arg9[%c1_67, %93, %c0_68] : memref<4x8x8xf32, #tpu.memory_space<vmem>>, vector<1x8x8xf32>
      %95 = vector.shape_cast %94 : vector<1x8x8xf32> to vector<8x8xf32>
      %96 = vector.shape_cast %88 : vector<8x8xf32> to vector<1x8x8xf32>
      tpu.vector_store %arg9[%c1_67, %93, %c0_68], %96 {strides = array<i32>} : memref<4x8x8xf32, #tpu.memory_space<vmem>>, vector<1x8x8xf32>,
      %97 = vector.extract_strided_slice %76 {offsets = [0, 16], sizes = [8, 8], strides = [1, 1]} : vector<8x64xf32> to vector<8x8xf32>
      %98 = vector.extract_strided_slice %76 {offsets = [0, 48], sizes = [8, 8], strides = [1, 1]} : vector<8x64xf32> to vector<8x8xf32>
      %c2_69 = arith.constant 2 : index
      %99 = arith.index_cast %72 : i32 to index
      %c0_70 = arith.constant 0 : index
      %100 = vector.load %arg8[%c2_69, %99, %c0_70] : memref<4x8x8xf32, #tpu.memory_space<vmem>>, vector<1x8x8xf32>
      %101 = vector.shape_cast %100 : vector<1x8x8xf32> to vector<8x8xf32>
      %102 = vector.shape_cast %97 : vector<8x8xf32> to vector<1x8x8xf32>
      tpu.vector_store %arg8[%c2_69, %99, %c0_70], %102 {strides = array<i32>} : memref<4x8x8xf32, #tpu.memory_space<vmem>>, vector<1x8x8xf32>,
      %c2_71 = arith.constant 2 : index
      %103 = arith.index_cast %72 : i32 to index
      %c0_72 = arith.constant 0 : index
      %104 = vector.load %arg9[%c2_71, %103, %c0_72] : memref<4x8x8xf32, #tpu.memory_space<vmem>>, vector<1x8x8xf32>
      %105 = vector.shape_cast %104 : vector<1x8x8xf32> to vector<8x8xf32>
      %106 = vector.shape_cast %98 : vector<8x8xf32> to vector<1x8x8xf32>
      tpu.vector_store %arg9[%c2_71, %103, %c0_72], %106 {strides = array<i32>} : memref<4x8x8xf32, #tpu.memory_space<vmem>>, vector<1x8x8xf32>,
      %107 = vector.extract_strided_slice %76 {offsets = [0, 24], sizes = [8, 8], strides = [1, 1]} : vector<8x64xf32> to vector<8x8xf32>
      %108 = vector.extract_strided_slice %76 {offsets = [0, 56], sizes = [8, 8], strides = [1, 1]} : vector<8x64xf32> to vector<8x8xf32>
      %c3_73 = arith.constant 3 : index
      %109 = arith.index_cast %72 : i32 to index
      %c0_74 = arith.constant 0 : index
      %110 = vector.load %arg8[%c3_73, %109, %c0_74] : memref<4x8x8xf32, #tpu.memory_space<vmem>>, vector<1x8x8xf32>
      %111 = vector.shape_cast %110 : vector<1x8x8xf32> to vector<8x8xf32>
      %112 = vector.shape_cast %107 : vector<8x8xf32> to vector<1x8x8xf32>
      tpu.vector_store %arg8[%c3_73, %109, %c0_74], %112 {strides = array<i32>} : memref<4x8x8xf32, #tpu.memory_space<vmem>>, vector<1x8x8xf32>,
      %c3_75 = arith.constant 3 : index
      %113 = arith.index_cast %72 : i32 to index
      %c0_76 = arith.constant 0 : index
      %114 = vector.load %arg9[%c3_75, %113, %c0_76] : memref<4x8x8xf32, #tpu.memory_space<vmem>>, vector<1x8x8xf32>
      %115 = vector.shape_cast %114 : vector<1x8x8xf32> to vector<8x8xf32>
      %116 = vector.shape_cast %108 : vector<8x8xf32> to vector<1x8x8xf32>
      tpu.vector_store %arg9[%c3_75, %113, %c0_76], %116 {strides = array<i32>} : memref<4x8x8xf32, #tpu.memory_space<vmem>>, vector<1x8x8xf32>,
      %c1_i32_77 = arith.constant 1 : i32
    } else {
    }
    %c8_i32 = arith.constant 8 : i32
    %3 = arith.muli %arg1, %c8_i32 : i32
    %4 = tpu.assume_multiple %3, 8 : i32
    %c0 = arith.constant 0 : index
    %5 = arith.index_cast %4 : i32 to index
    %c0_1 = arith.constant 0 : index
    %6 = vector.load %arg2[%c0, %5, %c0_1] : memref<1x8x32xf32, #tpu.memory_space<vmem>>, vector<1x8x32xf32>
    %7 = vector.shape_cast %6 : vector<1x8x32xf32> to vector<8x32xf32>
    %c0_2 = arith.constant 0 : index
    %c0_3 = arith.constant 0 : index
    %8 = vector.load %arg3[%c0_2, %c0_3] : memref<32x32xf32, #tpu.memory_space<vmem>>, vector<32x32xf32>
    %cst = arith.constant dense<0.000000e+00> : vector<8x32xf32>
    %9 = tpu.matmul %7, %8, %cst {dimension_numbers = #tpu.dot_dimension_numbers<[1], [0], [0], [1], [0, 0, 1, 1], [], []>} : vector<8x32xf32>, vector<32x32xf32>, vector<8x32xf32> -> vector<8x32xf32>
    %cst_4 = arith.constant 0.353553385 : f32
    %10 = vector.broadcast %cst_4 : f32 to vector<8x32xf32>
    %11 = arith.mulf %9, %10 : vector<8x32xf32>
    %12 = vector.extract_strided_slice %11 {offsets = [0, 0], sizes = [8, 8], strides = [1, 1]} : vector<8x32xf32> to vector<8x8xf32>
    %c0_5 = arith.constant 0 : index
    %c0_6 = arith.constant 0 : index
    %c0_7 = arith.constant 0 : index
    %13 = vector.load %arg10[%c0_5, %c0_6, %c0_7] : memref<4x8x8xf32, #tpu.memory_space<vmem>>, vector<1x8x8xf32>
    %14 = vector.shape_cast %13 : vector<1x8x8xf32> to vector<8x8xf32>
    %15 = vector.shape_cast %12 : vector<8x8xf32> to vector<1x8x8xf32>
    tpu.vector_store %arg10[%c0_5, %c0_6, %c0_7], %15 {strides = array<i32>} : memref<4x8x8xf32, #tpu.memory_space<vmem>>, vector<1x8x8xf32>,
    %16 = vector.extract_strided_slice %11 {offsets = [0, 8], sizes = [8, 8], strides = [1, 1]} : vector<8x32xf32> to vector<8x8xf32>
    %c1 = arith.constant 1 : index
    %c0_8 = arith.constant 0 : index
    %c0_9 = arith.constant 0 : index
    %17 = vector.load %arg10[%c1, %c0_8, %c0_9] : memref<4x8x8xf32, #tpu.memory_space<vmem>>, vector<1x8x8xf32>
    %18 = vector.shape_cast %17 : vector<1x8x8xf32> to vector<8x8xf32>
    %19 = vector.shape_cast %16 : vector<8x8xf32> to vector<1x8x8xf32>
    tpu.vector_store %arg10[%c1, %c0_8, %c0_9], %19 {strides = array<i32>} : memref<4x8x8xf32, #tpu.memory_space<vmem>>, vector<1x8x8xf32>,
    %20 = vector.extract_strided_slice %11 {offsets = [0, 16], sizes = [8, 8], strides = [1, 1]} : vector<8x32xf32> to vector<8x8xf32>
    %c2 = arith.constant 2 : index
    %c0_10 = arith.constant 0 : index
    %c0_11 = arith.constant 0 : index
    %21 = vector.load %arg10[%c2, %c0_10, %c0_11] : memref<4x8x8xf32, #tpu.memory_space<vmem>>, vector<1x8x8xf32>
    %22 = vector.shape_cast %21 : vector<1x8x8xf32> to vector<8x8xf32>
    %23 = vector.shape_cast %20 : vector<8x8xf32> to vector<1x8x8xf32>
    tpu.vector_store %arg10[%c2, %c0_10, %c0_11], %23 {strides = array<i32>} : memref<4x8x8xf32, #tpu.memory_space<vmem>>, vector<1x8x8xf32>,
    %24 = vector.extract_strided_slice %11 {offsets = [0, 24], sizes = [8, 8], strides = [1, 1]} : vector<8x32xf32> to vector<8x8xf32>
    %c3 = arith.constant 3 : index
    %c0_12 = arith.constant 0 : index
    %c0_13 = arith.constant 0 : index
    %25 = vector.load %arg10[%c3, %c0_12, %c0_13] : memref<4x8x8xf32, #tpu.memory_space<vmem>>, vector<1x8x8xf32>
    %26 = vector.shape_cast %25 : vector<1x8x8xf32> to vector<8x8xf32>
    %27 = vector.shape_cast %24 : vector<8x8xf32> to vector<1x8x8xf32>
    tpu.vector_store %arg10[%c3, %c0_12, %c0_13], %27 {strides = array<i32>} : memref<4x8x8xf32, #tpu.memory_space<vmem>>, vector<1x8x8xf32>,
    %c0_14 = arith.constant 0 : index
    %c0_15 = arith.constant 0 : index
    %c0_16 = arith.constant 0 : index
    %28 = vector.load %arg10[%c0_14, %c0_15, %c0_16] : memref<4x8x8xf32, #tpu.memory_space<vmem>>, vector<4x8x8xf32>
    %cst_17 = arith.constant -1.000000e+30 : f32
    %29 = vector.broadcast %cst_17 : f32 to vector<4x8x1xf32>
    %c0_18 = arith.constant 0 : index
    %c0_19 = arith.constant 0 : index
    %c0_20 = arith.constant 0 : index
    %30 = vector.load %arg11[%c0_18, %c0_19, %c0_20] : memref<4x8x1xf32, #tpu.memory_space<vmem>>, vector<4x8x1xf32>
    tpu.vector_store %arg11[%c0_18, %c0_19, %c0_20], %29 {strides = array<i32>} : memref<4x8x1xf32, #tpu.memory_space<vmem>>, vector<4x8x1xf32>,
    %cst_21 = arith.constant 0.000000e+00 : f32
    %31 = vector.broadcast %cst_21 : f32 to vector<4x8x1xf32>
    %c0_22 = arith.constant 0 : index
    %c0_23 = arith.constant 0 : index
    %c0_24 = arith.constant 0 : index
    %32 = vector.load %arg12[%c0_22, %c0_23, %c0_24] : memref<4x8x1xf32, #tpu.memory_space<vmem>>, vector<4x8x1xf32>
    tpu.vector_store %arg12[%c0_22, %c0_23, %c0_24], %31 {strides = array<i32>} : memref<4x8x1xf32, #tpu.memory_space<vmem>>, vector<4x8x1xf32>,
    %cst_25 = arith.constant 0.000000e+00 : f32
    %33 = vector.broadcast %cst_25 : f32 to vector<4x8x8xf32>
    %c0_26 = arith.constant 0 : index
    %c0_27 = arith.constant 0 : index
    %c0_28 = arith.constant 0 : index
    %34 = vector.load %arg13[%c0_26, %c0_27, %c0_28] : memref<4x8x8xf32, #tpu.memory_space<vmem>>, vector<4x8x8xf32>
    tpu.vector_store %arg13[%c0_26, %c0_27, %c0_28], %33 {strides = array<i32>} : memref<4x8x8xf32, #tpu.memory_space<vmem>>, vector<4x8x8xf32>,
    %c8_i32_29 = arith.constant 8 : i32
    %35 = arith.muli %arg1, %c8_i32_29 : i32
    %36 = tpu.iota {dimensions = array<i32: 0>} : vector<8x1xi32>
    %37 = vector.broadcast %35 : i32 to vector<8x1xi32>
    %38 = arith.addi %37, %36 : vector<8x1xi32>
    %c1_i32 = arith.constant 1 : i32
    %39 = arith.addi %arg1, %c1_i32 : i32
    %c0_i32_30 = arith.constant 0 : i32
    %40 = arith.subi %39, %c0_i32_30 : i32
    %c1_i32_31 = arith.constant 1 : i32
    %c1_i32_32 = arith.constant 1 : i32
    %41 = arith.subi %c1_i32_31, %c1_i32_32 : i32
    %42 = arith.addi %40, %41 : i32
    %c1_i32_33 = arith.constant 1 : i32
    %43 = arith.divsi %42, %c1_i32_33 : i32
    %c1_i32_34 = arith.constant 1 : i32
    %c0_i32_35 = arith.constant 0 : i32
    %c0_i32_36 = arith.constant 0 : i32
    %44 = arith.subi %43, %c0_i32_36 : i32
    %45 = arith.addi %c0_i32_36, %44 : i32
    %c1_i32_37 = arith.constant 1 : i32
    scf.for %arg14 = %c0_i32_36 to %45 step %c1_i32_37  : i32 {
      %68 = arith.muli %arg14, %c1_i32_34 : i32
      %69 = arith.addi %c0_i32_35, %68 : i32
      %c8_i32_52 = arith.constant 8 : i32
      %70 = arith.muli %69, %c8_i32_52 : i32
      %71 = tpu.assume_multiple %70, 8 : i32
      %c0_53 = arith.constant 0 : index
      %72 = arith.index_cast %71 : i32 to index
      %c0_54 = arith.constant 0 : index
      %73 = vector.load %arg8[%c0_53, %72, %c0_54] : memref<4x8x8xf32, #tpu.memory_space<vmem>>, vector<4x8x8xf32>
      %c0_55 = arith.constant 0 : index
      %74 = arith.index_cast %71 : i32 to index
      %c0_56 = arith.constant 0 : index
      %75 = vector.load %arg9[%c0_55, %74, %c0_56] : memref<4x8x8xf32, #tpu.memory_space<vmem>>, vector<4x8x8xf32>
      "tpu.trace_start"() <{level = 10 : i32, message = "hqd,hkd->hqk"}> : () -> ()
      %cst_57 = arith.constant dense<0.000000e+00> : vector<4x8x8xf32>
      %76 = tpu.matmul %28, %73, %cst_57 {dimension_numbers = #tpu.dot_dimension_numbers<[2], [2], [1], [1], [0, 0, 0, 1, 1, 1], [0], [0]>} : vector<4x8x8xf32>, vector<4x8x8xf32>, vector<4x8x8xf32> -> vector<4x8x8xf32>
      "tpu.trace_stop"() : () -> ()
      %77 = tpu.iota {dimensions = array<i32: 1>} : vector<1x8xi32>
      %78 = vector.broadcast %71 : i32 to vector<1x8xi32>
      %79 = arith.addi %78, %77 : vector<1x8xi32>
      %80 = vector.broadcast %79 : vector<1x8xi32> to vector<8x8xi32>
      %81 = vector.broadcast %38 : vector<8x1xi32> to vector<8x8xi32>
      %82 = arith.cmpi sle, %80, %81 : vector<8x8xi32>
      %cst_58 = arith.constant -1.000000e+30 : f32
      %83 = vector.shape_cast %82 : vector<8x8xi1> to vector<1x8x8xi1>
      %84 = vector.broadcast %83 : vector<1x8x8xi1> to vector<4x8x8xi1>
      %85 = vector.broadcast %cst_58 : f32 to vector<4x8x8xf32>
      %86 = arith.select %84, %76, %85 : vector<4x8x8xi1>, vector<4x8x8xf32>
      %c0_59 = arith.constant 0 : index
      %c0_60 = arith.constant 0 : index
      %c0_61 = arith.constant 0 : index
      %87 = vector.load %arg11[%c0_59, %c0_60, %c0_61] : memref<4x8x1xf32, #tpu.memory_space<vmem>>, vector<4x8x1xf32>
      %cst_62 = arith.constant dense<0xFF800000> : vector<4x8xf32>
      %88 = vector.multi_reduction <maximumf>, %86, %cst_62 [2] : vector<4x8x8xf32> to vector<4x8xf32>
      %89 = vector.shape_cast %88 : vector<4x8xf32> to vector<4x8x1xf32>
      %90 = arith.maximumf %87, %89 : vector<4x8x1xf32>
      %91 = arith.subf %87, %90 : vector<4x8x1xf32>
      %92 = math.exp %91 : vector<4x8x1xf32>
      %93 = vector.broadcast %90 : vector<4x8x1xf32> to vector<4x8x8xf32>
      %94 = arith.subf %86, %93 : vector<4x8x8xf32>
      %95 = math.exp %94 : vector<4x8x8xf32>
      %c0_63 = arith.constant 0 : index
      %c0_64 = arith.constant 0 : index
      %c0_65 = arith.constant 0 : index
      %96 = vector.load %arg12[%c0_63, %c0_64, %c0_65] : memref<4x8x1xf32, #tpu.memory_space<vmem>>, vector<4x8x1xf32>
      %97 = arith.mulf %92, %96 : vector<4x8x1xf32>
      %cst_66 = arith.constant dense<0.000000e+00> : vector<4x8xf32>
      %98 = vector.multi_reduction <add>, %95, %cst_66 [2] : vector<4x8x8xf32> to vector<4x8xf32>
      %99 = vector.shape_cast %98 : vector<4x8xf32> to vector<4x8x1xf32>
      %100 = arith.addf %97, %99 : vector<4x8x1xf32>
      %c0_67 = arith.constant 0 : index
      %c0_68 = arith.constant 0 : index
      %c0_69 = arith.constant 0 : index
      %101 = vector.load %arg12[%c0_67, %c0_68, %c0_69] : memref<4x8x1xf32, #tpu.memory_space<vmem>>, vector<4x8x1xf32>
      tpu.vector_store %arg12[%c0_67, %c0_68, %c0_69], %100 {strides = array<i32>} : memref<4x8x1xf32, #tpu.memory_space<vmem>>, vector<4x8x1xf32>,
      %c0_70 = arith.constant 0 : index
      %c0_71 = arith.constant 0 : index
      %c0_72 = arith.constant 0 : index
      %102 = vector.load %arg13[%c0_70, %c0_71, %c0_72] : memref<4x8x8xf32, #tpu.memory_space<vmem>>, vector<4x8x8xf32>
      %103 = vector.broadcast %92 : vector<4x8x1xf32> to vector<4x8x8xf32>
      %104 = arith.mulf %103, %102 : vector<4x8x8xf32>
      "tpu.trace_start"() <{level = 10 : i32, message = "hqk,hkd->hqd"}> : () -> ()
      %cst_73 = arith.constant dense<0.000000e+00> : vector<4x8x8xf32>
      %105 = tpu.matmul %95, %75, %cst_73 {dimension_numbers = #tpu.dot_dimension_numbers<[2], [1], [1], [2], [0, 0, 0, 1, 1, 2], [0], [0]>} : vector<4x8x8xf32>, vector<4x8x8xf32>, vector<4x8x8xf32> -> vector<4x8x8xf32>
      "tpu.trace_stop"() : () -> ()
      %106 = arith.addf %104, %105 : vector<4x8x8xf32>
      %c0_74 = arith.constant 0 : index
      %c0_75 = arith.constant 0 : index
      %c0_76 = arith.constant 0 : index
      %107 = vector.load %arg13[%c0_74, %c0_75, %c0_76] : memref<4x8x8xf32, #tpu.memory_space<vmem>>, vector<4x8x8xf32>
      tpu.vector_store %arg13[%c0_74, %c0_75, %c0_76], %106 {strides = array<i32>} : memref<4x8x8xf32, #tpu.memory_space<vmem>>, vector<4x8x8xf32>,
      %c0_77 = arith.constant 0 : index
      %c0_78 = arith.constant 0 : index
      %c0_79 = arith.constant 0 : index
      %108 = vector.load %arg11[%c0_77, %c0_78, %c0_79] : memref<4x8x1xf32, #tpu.memory_space<vmem>>, vector<4x8x1xf32>
      tpu.vector_store %arg11[%c0_77, %c0_78, %c0_79], %90 {strides = array<i32>} : memref<4x8x1xf32, #tpu.memory_space<vmem>>, vector<4x8x1xf32>,
    }
    %c0_38 = arith.constant 0 : index
    %c0_39 = arith.constant 0 : index
    %c0_40 = arith.constant 0 : index
    %46 = vector.load %arg13[%c0_38, %c0_39, %c0_40] : memref<4x8x8xf32, #tpu.memory_space<vmem>>, vector<4x8x8xf32>
    %c0_41 = arith.constant 0 : index
    %c0_42 = arith.constant 0 : index
    %c0_43 = arith.constant 0 : index
    %47 = vector.load %arg12[%c0_41, %c0_42, %c0_43] : memref<4x8x1xf32, #tpu.memory_space<vmem>>, vector<4x8x1xf32>
    %48 = tpu.reciprocal %47 {approx = true} : vector<4x8x1xf32> -> vector<4x8x1xf32>
    %49 = vector.broadcast %48 : vector<4x8x1xf32> to vector<4x8x8xf32>
    %50 = arith.mulf %46, %49 : vector<4x8x8xf32>
    %51 = vector.extract_strided_slice %50 {offsets = [0, 0, 0], sizes = [1, 8, 8], strides = [1, 1, 1]} : vector<4x8x8xf32> to vector<1x8x8xf32>
    %52 = vector.shape_cast %51 : vector<1x8x8xf32> to vector<8x8xf32>
    %53 = vector.extract_strided_slice %50 {offsets = [1, 0, 0], sizes = [1, 8, 8], strides = [1, 1, 1]} : vector<4x8x8xf32> to vector<1x8x8xf32>
    %54 = vector.shape_cast %53 : vector<1x8x8xf32> to vector<8x8xf32>
    %55 = vector.extract_strided_slice %50 {offsets = [2, 0, 0], sizes = [1, 8, 8], strides = [1, 1, 1]} : vector<4x8x8xf32> to vector<1x8x8xf32>
    %56 = vector.shape_cast %55 : vector<1x8x8xf32> to vector<8x8xf32>
    %57 = vector.extract_strided_slice %50 {offsets = [3, 0, 0], sizes = [1, 8, 8], strides = [1, 1, 1]} : vector<4x8x8xf32> to vector<1x8x8xf32>
    %58 = vector.shape_cast %57 : vector<1x8x8xf32> to vector<8x8xf32>
    %59 = tpu.concatenate %52, %54, %56, %58 in 1 : vector<8x8xf32>, vector<8x8xf32>, vector<8x8xf32>, vector<8x8xf32> -> vector<8x32xf32>
    %c0_44 = arith.constant 0 : index
    %c0_45 = arith.constant 0 : index
    %60 = vector.load %arg5[%c0_44, %c0_45] : memref<32x32xf32, #tpu.memory_space<vmem>>, vector<32x32xf32>
    %cst_46 = arith.constant dense<0.000000e+00> : vector<8x32xf32>
    %61 = tpu.matmul %59, %60, %cst_46 {dimension_numbers = #tpu.dot_dimension_numbers<[1], [0], [0], [1], [0, 0, 1, 1], [], []>} : vector<8x32xf32>, vector<32x32xf32>, vector<8x32xf32> -> vector<8x32xf32>
    %c0_47 = arith.constant 0 : index
    %c0_48 = arith.constant 0 : index
    %62 = vector.load %arg6[%c0_47, %c0_48] : memref<1x32xf32, #tpu.memory_space<vmem>>, vector<1x32xf32>
    %63 = vector.broadcast %62 : vector<1x32xf32> to vector<8x32xf32>
    %64 = arith.addf %61, %63 : vector<8x32xf32>
    %c0_49 = arith.constant 0 : index
    %c0_50 = arith.constant 0 : index
    %c0_51 = arith.constant 0 : index
    %65 = vector.load %arg7[%c0_49, %c0_50, %c0_51] : memref<1x8x32xf32, #tpu.memory_space<vmem>>, vector<1x8x32xf32>
    %66 = vector.shape_cast %65 : vector<1x8x32xf32> to vector<8x32xf32>
    %67 = vector.shape_cast %64 : vector<8x32xf32> to vector<1x8x32xf32>
    tpu.vector_store %arg7[%c0_49, %c0_50, %c0_51], %67 {strides = array<i32>} : memref<1x8x32xf32, #tpu.memory_space<vmem>>, vector<1x8x32xf32>,
    return
  }
  func.func @transform_0(%arg0: i32, %arg1: i32) -> (i32, i32, i32) {
    %c0_i32 = arith.constant 0 : i32
    %c0_i32_0 = arith.constant 0 : i32
    %c0_i32_1 = arith.constant 0 : i32
    return %arg0, %c0_i32, %c0_i32_0 : i32, i32, i32
  }
  func.func @transform_1(%arg0: i32, %arg1: i32) -> (i32, i32) {
    %c0_i32 = arith.constant 0 : i32
    %c0_i32_0 = arith.constant 0 : i32
    %c0_i32_1 = arith.constant 0 : i32
    return %c0_i32, %c0_i32_0 : i32, i32
  }
  func.func @transform_2(%arg0: i32, %arg1: i32) -> (i32, i32) {
    %c0_i32 = arith.constant 0 : i32
    %c0_i32_0 = arith.constant 0 : i32
    %c0_i32_1 = arith.constant 0 : i32
    return %c0_i32, %c0_i32_0 : i32, i32
  }
  func.func @transform_3(%arg0: i32, %arg1: i32) -> (i32, i32) {
    %c0_i32 = arith.constant 0 : i32
    %c0_i32_0 = arith.constant 0 : i32
    %c0_i32_1 = arith.constant 0 : i32
    return %c0_i32, %c0_i32_0 : i32, i32
  }
  func.func @transform_4(%arg0: i32, %arg1: i32) -> (i32, i32) {
    %c0_i32 = arith.constant 0 : i32
    %c0_i32_0 = arith.constant 0 : i32
    %c0_i32_1 = arith.constant 0 : i32
    return %c0_i32, %c0_i32_0 : i32, i32
  }
  func.func @transform_5(%arg0: i32, %arg1: i32) -> (i32, i32, i32) {
    %c0_i32 = arith.constant 0 : i32
    %c0_i32_0 = arith.constant 0 : i32
    return %arg0, %arg1, %c0_i32 : i32, i32, i32
  }
}

module attributes {stable_mosaic.version = 11 : i64} {
  func.func @mha_kernel(%arg0: i32, %arg1: i32, %arg2: memref<1x8x32xf32, #tpu.memory_space<vmem>>, %arg3: memref<32x32xf32, #tpu.memory_space<vmem>>, %arg4: memref<32x64xf32, #tpu.memory_space<vmem>>, %arg5: memref<32x32xf32, #tpu.memory_space<vmem>>, %arg6: memref<1x32xf32, #tpu.memory_space<vmem>>, %arg7: memref<1x8x32xf32, #tpu.memory_space<vmem>>, %arg8: memref<4x8x8xf32, #tpu.memory_space<vmem>>, %arg9: memref<4x8x8xf32, #tpu.memory_space<vmem>>, %arg10: memref<4x8x8xf32, #tpu.memory_space<vmem>>, %arg11: memref<4x8x1xf32, #tpu.memory_space<vmem>>, %arg12: memref<4x8x1xf32, #tpu.memory_space<vmem>>, %arg13: memref<4x8x8xf32, #tpu.memory_space<vmem>>) attributes {dimension_semantics = [#tpu.dimension_semantics<parallel>, #tpu.dimension_semantics<arbitrary>], iteration_bounds = array<i64: 2, 1>, scalar_prefetch = 0 : i64, scratch_operands = 6 : i64, tpu.core_type = #tpu.core_type<tc>, window_params = [{transform_indices = @transform_0, window_bounds = array<i64: 1, 8, 32>}, {pipeline_mode = #tpu.pipeline_mode<synchronous>, transform_indices = @transform_1, window_bounds = array<i64: 32, 32>}, {pipeline_mode = #tpu.pipeline_mode<synchronous>, transform_indices = @transform_2, window_bounds = array<i64: 32, 64>}, {pipeline_mode = #tpu.pipeline_mode<synchronous>, transform_indices = @transform_3, window_bounds = array<i64: 32, 32>}, {pipeline_mode = #tpu.pipeline_mode<synchronous>, transform_indices = @transform_4, window_bounds = array<i64: 1, 32>}, {transform_indices = @transform_5, window_bounds = array<i64: 1, 8, 32>}]} {
    %c0_i32 = arith.constant 0 : i32
    %0 = arith.cmpi eq, %arg1, %c0_i32 : i32
    %1 = arith.extui %0 : i1 to i32
    %c0_i32_0 = arith.constant 0 : i32
    %2 = arith.cmpi ne, %1, %c0_i32_0 : i32
    scf.if %2 {
      %c0_52 = arith.constant 0 : index
      %c0_53 = arith.constant 0 : index
      %68 = vector.load %arg4[%c0_52, %c0_53] : memref<32x64xf32, #tpu.memory_space<vmem>>, vector<32x64xf32>
      %c0_i32_54 = arith.constant 0 : i32
      %c1_i32_55 = arith.constant 1 : i32
      %69 = arith.muli %c0_i32_54, %c1_i32_55 : i32
      %c0_i32_56 = arith.constant 0 : i32
      %70 = arith.addi %c0_i32_56, %69 : i32
      %c8_i32_57 = arith.constant 8 : i32
      %71 = arith.muli %70, %c8_i32_57 : i32
      %72 = tpu.assume_multiple %71, 8 : i32
      %c0_58 = arith.constant 0 : index
      %73 = arith.index_cast %72 : i32 to index
      %c0_59 = arith.constant 0 : index
      %74 = vector.load %arg2[%c0_58, %73, %c0_59] : memref<1x8x32xf32, #tpu.memory_space<vmem>>, vector<1x8x32xf32>
      %75 = vector.shape_cast %74 : vector<1x8x32xf32> to vector<8x32xf32>
      %cst_60 = arith.constant dense<0.000000e+00> : vector<8x64xf32>
      %76 = tpu.matmul %75, %68, %cst_60 {dimension_numbers = #tpu.dot_dimension_numbers<[1], [0], [0], [1], [0, 0, 1, 1], [], []>} : vector<8x32xf32>, vector<32x64xf32>, vector<8x64xf32> -> vector<8x64xf32>
      %77 = vector.extract_strided_slice %76 {offsets = [0, 0], sizes = [8, 8], strides = [1, 1]} : vector<8x64xf32> to vector<8x8xf32>
      %78 = vector.extract_strided_slice %76 {offsets = [0, 32], sizes = [8, 8], strides = [1, 1]} : vector<8x64xf32> to vector<8x8xf32>
      %c0_61 = arith.constant 0 : index
      %79 = arith.index_cast %72 : i32 to index
      %c0_62 = arith.constant 0 : index
      %80 = vector.load %arg8[%c0_61, %79, %c0_62] : memref<4x8x8xf32, #tpu.memory_space<vmem>>, vector<1x8x8xf32>
      %81 = vector.shape_cast %80 : vector<1x8x8xf32> to vector<8x8xf32>
      %82 = vector.shape_cast %77 : vector<8x8xf32> to vector<1x8x8xf32>
      tpu.vector_store %arg8[%c0_61, %79, %c0_62], %82 {strides = array<i32>} : memref<4x8x8xf32, #tpu.memory_space<vmem>>, vector<1x8x8xf32>,
      %c0_63 = arith.constant 0 : index
      %83 = arith.index_cast %72 : i32 to index
      %c0_64 = arith.constant 0 : index
      %84 = vector.load %arg9[%c0_63, %83, %c0_64] : memref<4x8x8xf32, #tpu.memory_space<vmem>>, vector<1x8x8xf32>
      %85 = vector.shape_cast %84 : vector<1x8x8xf32> to vector<8x8xf32>
      %86 = vector.shape_cast %78 : vector<8x8xf32> to vector<1x8x8xf32>
      tpu.vector_store %arg9[%c0_63, %83, %c0_64], %86 {strides = array<i32>} : memref<4x8x8xf32, #tpu.memory_space<vmem>>, vector<1x8x8xf32>,
      %87 = vector.extract_strided_slice %76 {offsets = [0, 8], sizes = [8, 8], strides = [1, 1]} : vector<8x64xf32> to vector<8x8xf32>
      %88 = vector.extract_strided_slice %76 {offsets = [0, 40], sizes = [8, 8], strides = [1, 1]} : vector<8x64xf32> to vector<8x8xf32>
      %c1_65 = arith.constant 1 : index
      %89 = arith.index_cast %72 : i32 to index
      %c0_66 = arith.constant 0 : index
      %90 = vector.load %arg8[%c1_65, %89, %c0_66] : memref<4x8x8xf32, #tpu.memory_space<vmem>>, vector<1x8x8xf32>
      %91 = vector.shape_cast %90 : vector<1x8x8xf32> to vector<8x8xf32>
      %92 = vector.shape_cast %87 : vector<8x8xf32> to vector<1x8x8xf32>
      tpu.vector_store %arg8[%c1_65, %89, %c0_66], %92 {strides = array<i32>} : memref<4x8x8xf32, #tpu.memory_space<vmem>>, vector<1x8x8xf32>,
      %c1_67 = arith.constant 1 : index
      %93 = arith.index_cast %72 : i32 to index
      %c0_68 = arith.constant 0 : index
      %94 = vector.load %arg9[%c1_67, %93, %c0_68] : memref<4x8x8xf32, #tpu.memory_space<vmem>>, vector<1x8x8xf32>
      %95 = vector.shape_cast %94 : vector<1x8x8xf32> to vector<8x8xf32>
      %96 = vector.shape_cast %88 : vector<8x8xf32> to vector<1x8x8xf32>
      tpu.vector_store %arg9[%c1_67, %93, %c0_68], %96 {strides = array<i32>} : memref<4x8x8xf32, #tpu.memory_space<vmem>>, vector<1x8x8xf32>,
      %97 = vector.extract_strided_slice %76 {offsets = [0, 16], sizes = [8, 8], strides = [1, 1]} : vector<8x64xf32> to vector<8x8xf32>
      %98 = vector.extract_strided_slice %76 {offsets = [0, 48], sizes = [8, 8], strides = [1, 1]} : vector<8x64xf32> to vector<8x8xf32>
      %c2_69 = arith.constant 2 : index
      %99 = arith.index_cast %72 : i32 to index
      %c0_70 = arith.constant 0 : index
      %100 = vector.load %arg8[%c2_69, %99, %c0_70] : memref<4x8x8xf32, #tpu.memory_space<vmem>>, vector<1x8x8xf32>
      %101 = vector.shape_cast %100 : vector<1x8x8xf32> to vector<8x8xf32>
      %102 = vector.shape_cast %97 : vector<8x8xf32> to vector<1x8x8xf32>
      tpu.vector_store %arg8[%c2_69, %99, %c0_70], %102 {strides = array<i32>} : memref<4x8x8xf32, #tpu.memory_space<vmem>>, vector<1x8x8xf32>,
      %c2_71 = arith.constant 2 : index
      %103 = arith.index_cast %72 : i32 to index
      %c0_72 = arith.constant 0 : index
      %104 = vector.load %arg9[%c2_71, %103, %c0_72] : memref<4x8x8xf32, #tpu.memory_space<vmem>>, vector<1x8x8xf32>
      %105 = vector.shape_cast %104 : vector<1x8x8xf32> to vector<8x8xf32>
      %106 = vector.shape_cast %98 : vector<8x8xf32> to vector<1x8x8xf32>
      tpu.vector_store %arg9[%c2_71, %103, %c0_72], %106 {strides = array<i32>} : memref<4x8x8xf32, #tpu.memory_space<vmem>>, vector<1x8x8xf32>,
      %107 = vector.extract_strided_slice %76 {offsets = [0, 24], sizes = [8, 8], strides = [1, 1]} : vector<8x64xf32> to vector<8x8xf32>
      %108 = vector.extract_strided_slice %76 {offsets = [0, 56], sizes = [8, 8], strides = [1, 1]} : vector<8x64xf32> to vector<8x8xf32>
      %c3_73 = arith.constant 3 : index
      %109 = arith.index_cast %72 : i32 to index
      %c0_74 = arith.constant 0 : index
      %110 = vector.load %arg8[%c3_73, %109, %c0_74] : memref<4x8x8xf32, #tpu.memory_space<vmem>>, vector<1x8x8xf32>
      %111 = vector.shape_cast %110 : vector<1x8x8xf32> to vector<8x8xf32>
      %112 = vector.shape_cast %107 : vector<8x8xf32> to vector<1x8x8xf32>
      tpu.vector_store %arg8[%c3_73, %109, %c0_74], %112 {strides = array<i32>} : memref<4x8x8xf32, #tpu.memory_space<vmem>>, vector<1x8x8xf32>,
      %c3_75 = arith.constant 3 : index
      %113 = arith.index_cast %72 : i32 to index
      %c0_76 = arith.constant 0 : index
      %114 = vector.load %arg9[%c3_75, %113, %c0_76] : memref<4x8x8xf32, #tpu.memory_space<vmem>>, vector<1x8x8xf32>
      %115 = vector.shape_cast %114 : vector<1x8x8xf32> to vector<8x8xf32>
      %116 = vector.shape_cast %108 : vector<8x8xf32> to vector<1x8x8xf32>
      tpu.vector_store %arg9[%c3_75, %113, %c0_76], %116 {strides = array<i32>} : memref<4x8x8xf32, #tpu.memory_space<vmem>>, vector<1x8x8xf32>,
      %c1_i32_77 = arith.constant 1 : i32
    } else {
    }
    %c8_i32 = arith.constant 8 : i32
    %3 = arith.muli %arg1, %c8_i32 : i32
    %4 = tpu.assume_multiple %3, 8 : i32
    %c0 = arith.constant 0 : index
    %5 = arith.index_cast %4 : i32 to index
    %c0_1 = arith.constant 0 : index
    %6 = vector.load %arg2[%c0, %5, %c0_1] : memref<1x8x32xf32, #tpu.memory_space<vmem>>, vector<1x8x32xf32>
    %7 = vector.shape_cast %6 : vector<1x8x32xf32> to vector<8x32xf32>
    %c0_2 = arith.constant 0 : index
    %c0_3 = arith.constant 0 : index
    %8 = vector.load %arg3[%c0_2, %c0_3] : memref<32x32xf32, #tpu.memory_space<vmem>>, vector<32x32xf32>
    %cst = arith.constant dense<0.000000e+00> : vector<8x32xf32>
    %9 = tpu.matmul %7, %8, %cst {dimension_numbers = #tpu.dot_dimension_numbers<[1], [0], [0], [1], [0, 0, 1, 1], [], []>} : vector<8x32xf32>, vector<32x32xf32>, vector<8x32xf32> -> vector<8x32xf32>
    %cst_4 = arith.constant 0.353553385 : f32
    %10 = vector.broadcast %cst_4 : f32 to vector<8x32xf32>
    %11 = arith.mulf %9, %10 : vector<8x32xf32>
    %12 = vector.extract_strided_slice %11 {offsets = [0, 0], sizes = [8, 8], strides = [1, 1]} : vector<8x32xf32> to vector<8x8xf32>
    %c0_5 = arith.constant 0 : index
    %c0_6 = arith.constant 0 : index
    %c0_7 = arith.constant 0 : index
    %13 = vector.load %arg10[%c0_5, %c0_6, %c0_7] : memref<4x8x8xf32, #tpu.memory_space<vmem>>, vector<1x8x8xf32>
    %14 = vector.shape_cast %13 : vector<1x8x8xf32> to vector<8x8xf32>
    %15 = vector.shape_cast %12 : vector<8x8xf32> to vector<1x8x8xf32>
    tpu.vector_store %arg10[%c0_5, %c0_6, %c0_7], %15 {strides = array<i32>} : memref<4x8x8xf32, #tpu.memory_space<vmem>>, vector<1x8x8xf32>,
    %16 = vector.extract_strided_slice %11 {offsets = [0, 8], sizes = [8, 8], strides = [1, 1]} : vector<8x32xf32> to vector<8x8xf32>
    %c1 = arith.constant 1 : index
    %c0_8 = arith.constant 0 : index
    %c0_9 = arith.constant 0 : index
    %17 = vector.load %arg10[%c1, %c0_8, %c0_9] : memref<4x8x8xf32, #tpu.memory_space<vmem>>, vector<1x8x8xf32>
    %18 = vector.shape_cast %17 : vector<1x8x8xf32> to vector<8x8xf32>
    %19 = vector.shape_cast %16 : vector<8x8xf32> to vector<1x8x8xf32>
    tpu.vector_store %arg10[%c1, %c0_8, %c0_9], %19 {strides = array<i32>} : memref<4x8x8xf32, #tpu.memory_space<vmem>>, vector<1x8x8xf32>,
    %20 = vector.extract_strided_slice %11 {offsets = [0, 16], sizes = [8, 8], strides = [1, 1]} : vector<8x32xf32> to vector<8x8xf32>
    %c2 = arith.constant 2 : index
    %c0_10 = arith.constant 0 : index
    %c0_11 = arith.constant 0 : index
    %21 = vector.load %arg10[%c2, %c0_10, %c0_11] : memref<4x8x8xf32, #tpu.memory_space<vmem>>, vector<1x8x8xf32>
    %22 = vector.shape_cast %21 : vector<1x8x8xf32> to vector<8x8xf32>
    %23 = vector.shape_cast %20 : vector<8x8xf32> to vector<1x8x8xf32>
    tpu.vector_store %arg10[%c2, %c0_10, %c0_11], %23 {strides = array<i32>} : memref<4x8x8xf32, #tpu.memory_space<vmem>>, vector<1x8x8xf32>,
    %24 = vector.extract_strided_slice %11 {offsets = [0, 24], sizes = [8, 8], strides = [1, 1]} : vector<8x32xf32> to vector<8x8xf32>
    %c3 = arith.constant 3 : index
    %c0_12 = arith.constant 0 : index
    %c0_13 = arith.constant 0 : index
    %25 = vector.load %arg10[%c3, %c0_12, %c0_13] : memref<4x8x8xf32, #tpu.memory_space<vmem>>, vector<1x8x8xf32>
    %26 = vector.shape_cast %25 : vector<1x8x8xf32> to vector<8x8xf32>
    %27 = vector.shape_cast %24 : vector<8x8xf32> to vector<1x8x8xf32>
    tpu.vector_store %arg10[%c3, %c0_12, %c0_13], %27 {strides = array<i32>} : memref<4x8x8xf32, #tpu.memory_space<vmem>>, vector<1x8x8xf32>,
    %c0_14 = arith.constant 0 : index
    %c0_15 = arith.constant 0 : index
    %c0_16 = arith.constant 0 : index
    %28 = vector.load %arg10[%c0_14, %c0_15, %c0_16] : memref<4x8x8xf32, #tpu.memory_space<vmem>>, vector<4x8x8xf32>
    %cst_17 = arith.constant -1.000000e+30 : f32
    %29 = vector.broadcast %cst_17 : f32 to vector<4x8x1xf32>
    %c0_18 = arith.constant 0 : index
    %c0_19 = arith.constant 0 : index
    %c0_20 = arith.constant 0 : index
    %30 = vector.load %arg11[%c0_18, %c0_19, %c0_20] : memref<4x8x1xf32, #tpu.memory_space<vmem>>, vector<4x8x1xf32>
    tpu.vector_store %arg11[%c0_18, %c0_19, %c0_20], %29 {strides = array<i32>} : memref<4x8x1xf32, #tpu.memory_space<vmem>>, vector<4x8x1xf32>,
    %cst_21 = arith.constant 0.000000e+00 : f32
    %31 = vector.broadcast %cst_21 : f32 to vector<4x8x1xf32>
    %c0_22 = arith.constant 0 : index
    %c0_23 = arith.constant 0 : index
    %c0_24 = arith.constant 0 : index
    %32 = vector.load %arg12[%c0_22, %c0_23, %c0_24] : memref<4x8x1xf32, #tpu.memory_space<vmem>>, vector<4x8x1xf32>
    tpu.vector_store %arg12[%c0_22, %c0_23, %c0_24], %31 {strides = array<i32>} : memref<4x8x1xf32, #tpu.memory_space<vmem>>, vector<4x8x1xf32>,
    %cst_25 = arith.constant 0.000000e+00 : f32
    %33 = vector.broadcast %cst_25 : f32 to vector<4x8x8xf32>
    %c0_26 = arith.constant 0 : index
    %c0_27 = arith.constant 0 : index
    %c0_28 = arith.constant 0 : index
    %34 = vector.load %arg13[%c0_26, %c0_27, %c0_28] : memref<4x8x8xf32, #tpu.memory_space<vmem>>, vector<4x8x8xf32>
    tpu.vector_store %arg13[%c0_26, %c0_27, %c0_28], %33 {strides = array<i32>} : memref<4x8x8xf32, #tpu.memory_space<vmem>>, vector<4x8x8xf32>,
    %c8_i32_29 = arith.constant 8 : i32
    %35 = arith.muli %arg1, %c8_i32_29 : i32
    %36 = tpu.iota {dimensions = array<i32: 0>} : vector<8x1xi32>
    %37 = vector.broadcast %35 : i32 to vector<8x1xi32>
    %38 = arith.addi %37, %36 : vector<8x1xi32>
    %c1_i32 = arith.constant 1 : i32
    %39 = arith.addi %arg1, %c1_i32 : i32
    %c0_i32_30 = arith.constant 0 : i32
    %40 = arith.subi %39, %c0_i32_30 : i32
    %c1_i32_31 = arith.constant 1 : i32
    %c1_i32_32 = arith.constant 1 : i32
    %41 = arith.subi %c1_i32_31, %c1_i32_32 : i32
    %42 = arith.addi %40, %41 : i32
    %c1_i32_33 = arith.constant 1 : i32
    %43 = arith.divsi %42, %c1_i32_33 : i32
    %c1_i32_34 = arith.constant 1 : i32
    %c0_i32_35 = arith.constant 0 : i32
    %c0_i32_36 = arith.constant 0 : i32
    %44 = arith.subi %43, %c0_i32_36 : i32
    %45 = arith.addi %c0_i32_36, %44 : i32
    %c1_i32_37 = arith.constant 1 : i32
    scf.for %arg14 = %c0_i32_36 to %45 step %c1_i32_37  : i32 {
      %68 = arith.muli %arg14, %c1_i32_34 : i32
      %69 = arith.addi %c0_i32_35, %68 : i32
      %c8_i32_52 = arith.constant 8 : i32
      %70 = arith.muli %69, %c8_i32_52 : i32
      %71 = tpu.assume_multiple %70, 8 : i32
      %c0_53 = arith.constant 0 : index
      %72 = arith.index_cast %71 : i32 to index
      %c0_54 = arith.constant 0 : index
      %73 = vector.load %arg8[%c0_53, %72, %c0_54] : memref<4x8x8xf32, #tpu.memory_space<vmem>>, vector<4x8x8xf32>
      %c0_55 = arith.constant 0 : index
      %74 = arith.index_cast %71 : i32 to index
      %c0_56 = arith.constant 0 : index
      %75 = vector.load %arg9[%c0_55, %74, %c0_56] : memref<4x8x8xf32, #tpu.memory_space<vmem>>, vector<4x8x8xf32>
      "tpu.trace_start"() <{level = 10 : i32, message = "hqd,hkd->hqk"}> : () -> ()
      %cst_57 = arith.constant dense<0.000000e+00> : vector<4x8x8xf32>
      %76 = tpu.matmul %28, %73, %cst_57 {dimension_numbers = #tpu.dot_dimension_numbers<[2], [2], [1], [1], [0, 0, 0, 1, 1, 1], [0], [0]>} : vector<4x8x8xf32>, vector<4x8x8xf32>, vector<4x8x8xf32> -> vector<4x8x8xf32>
      "tpu.trace_stop"() : () -> ()
      %77 = tpu.iota {dimensions = array<i32: 1>} : vector<1x8xi32>
      %78 = vector.broadcast %71 : i32 to vector<1x8xi32>
      %79 = arith.addi %78, %77 : vector<1x8xi32>
      %80 = vector.broadcast %79 : vector<1x8xi32> to vector<8x8xi32>
      %81 = vector.broadcast %38 : vector<8x1xi32> to vector<8x8xi32>
      %82 = arith.cmpi sle, %80, %81 : vector<8x8xi32>
      %cst_58 = arith.constant -1.000000e+30 : f32
      %83 = vector.shape_cast %82 : vector<8x8xi1> to vector<1x8x8xi1>
      %84 = vector.broadcast %83 : vector<1x8x8xi1> to vector<4x8x8xi1>
      %85 = vector.broadcast %cst_58 : f32 to vector<4x8x8xf32>
      %86 = arith.select %84, %76, %85 : vector<4x8x8xi1>, vector<4x8x8xf32>
      %c0_59 = arith.constant 0 : index
      %c0_60 = arith.constant 0 : index
      %c0_61 = arith.constant 0 : index
      %87 = vector.load %arg11[%c0_59, %c0_60, %c0_61] : memref<4x8x1xf32, #tpu.memory_space<vmem>>, vector<4x8x1xf32>
      %cst_62 = arith.constant dense<0xFF800000> : vector<4x8xf32>
      %88 = vector.multi_reduction <maximumf>, %86, %cst_62 [2] : vector<4x8x8xf32> to vector<4x8xf32>
      %89 = vector.shape_cast %88 : vector<4x8xf32> to vector<4x8x1xf32>
      %90 = arith.maximumf %87, %89 : vector<4x8x1xf32>
      %91 = arith.subf %87, %90 : vector<4x8x1xf32>
      %92 = math.exp %91 : vector<4x8x1xf32>
      %93 = vector.broadcast %90 : vector<4x8x1xf32> to vector<4x8x8xf32>
      %94 = arith.subf %86, %93 : vector<4x8x8xf32>
      %95 = math.exp %94 : vector<4x8x8xf32>
      %c0_63 = arith.constant 0 : index
      %c0_64 = arith.constant 0 : index
      %c0_65 = arith.constant 0 : index
      %96 = vector.load %arg12[%c0_63, %c0_64, %c0_65] : memref<4x8x1xf32, #tpu.memory_space<vmem>>, vector<4x8x1xf32>
      %97 = arith.mulf %92, %96 : vector<4x8x1xf32>
      %cst_66 = arith.constant dense<0.000000e+00> : vector<4x8xf32>
      %98 = vector.multi_reduction <add>, %95, %cst_66 [2] : vector<4x8x8xf32> to vector<4x8xf32>
      %99 = vector.shape_cast %98 : vector<4x8xf32> to vector<4x8x1xf32>
      %100 = arith.addf %97, %99 : vector<4x8x1xf32>
      %c0_67 = arith.constant 0 : index
      %c0_68 = arith.constant 0 : index
      %c0_69 = arith.constant 0 : index
      %101 = vector.load %arg12[%c0_67, %c0_68, %c0_69] : memref<4x8x1xf32, #tpu.memory_space<vmem>>, vector<4x8x1xf32>
      tpu.vector_store %arg12[%c0_67, %c0_68, %c0_69], %100 {strides = array<i32>} : memref<4x8x1xf32, #tpu.memory_space<vmem>>, vector<4x8x1xf32>,
      %c0_70 = arith.constant 0 : index
      %c0_71 = arith.constant 0 : index
      %c0_72 = arith.constant 0 : index
      %102 = vector.load %arg13[%c0_70, %c0_71, %c0_72] : memref<4x8x8xf32, #tpu.memory_space<vmem>>, vector<4x8x8xf32>
      %103 = vector.broadcast %92 : vector<4x8x1xf32> to vector<4x8x8xf32>
      %104 = arith.mulf %103, %102 : vector<4x8x8xf32>
      "tpu.trace_start"() <{level = 10 : i32, message = "hqk,hkd->hqd"}> : () -> ()
      %cst_73 = arith.constant dense<0.000000e+00> : vector<4x8x8xf32>
      %105 = tpu.matmul %95, %75, %cst_73 {dimension_numbers = #tpu.dot_dimension_numbers<[2], [1], [1], [2], [0, 0, 0, 1, 1, 2], [0], [0]>} : vector<4x8x8xf32>, vector<4x8x8xf32>, vector<4x8x8xf32> -> vector<4x8x8xf32>
      "tpu.trace_stop"() : () -> ()
      %106 = arith.addf %104, %105 : vector<4x8x8xf32>
      %c0_74 = arith.constant 0 : index
      %c0_75 = arith.constant 0 : index
      %c0_76 = arith.constant 0 : index
      %107 = vector.load %arg13[%c0_74, %c0_75, %c0_76] : memref<4x8x8xf32, #tpu.memory_space<vmem>>, vector<4x8x8xf32>
      tpu.vector_store %arg13[%c0_74, %c0_75, %c0_76], %106 {strides = array<i32>} : memref<4x8x8xf32, #tpu.memory_space<vmem>>, vector<4x8x8xf32>,
      %c0_77 = arith.constant 0 : index
      %c0_78 = arith.constant 0 : index
      %c0_79 = arith.constant 0 : index
      %108 = vector.load %arg11[%c0_77, %c0_78, %c0_79] : memref<4x8x1xf32, #tpu.memory_space<vmem>>, vector<4x8x1xf32>
      tpu.vector_store %arg11[%c0_77, %c0_78, %c0_79], %90 {strides = array<i32>} : memref<4x8x1xf32, #tpu.memory_space<vmem>>, vector<4x8x1xf32>,
    }
    %c0_38 = arith.constant 0 : index
    %c0_39 = arith.constant 0 : index
    %c0_40 = arith.constant 0 : index
    %46 = vector.load %arg13[%c0_38, %c0_39, %c0_40] : memref<4x8x8xf32, #tpu.memory_space<vmem>>, vector<4x8x8xf32>
    %c0_41 = arith.constant 0 : index
    %c0_42 = arith.constant 0 : index
    %c0_43 = arith.constant 0 : index
    %47 = vector.load %arg12[%c0_41, %c0_42, %c0_43] : memref<4x8x1xf32, #tpu.memory_space<vmem>>, vector<4x8x1xf32>
    %48 = tpu.reciprocal %47 {approx = true} : vector<4x8x1xf32> -> vector<4x8x1xf32>
    %49 = vector.broadcast %48 : vector<4x8x1xf32> to vector<4x8x8xf32>
    %50 = arith.mulf %46, %49 : vector<4x8x8xf32>
    %51 = vector.extract_strided_slice %50 {offsets = [0, 0, 0], sizes = [1, 8, 8], strides = [1, 1, 1]} : vector<4x8x8xf32> to vector<1x8x8xf32>
    %52 = vector.shape_cast %51 : vector<1x8x8xf32> to vector<8x8xf32>
    %53 = vector.extract_strided_slice %50 {offsets = [1, 0, 0], sizes = [1, 8, 8], strides = [1, 1, 1]} : vector<4x8x8xf32> to vector<1x8x8xf32>
    %54 = vector.shape_cast %53 : vector<1x8x8xf32> to vector<8x8xf32>
    %55 = vector.extract_strided_slice %50 {offsets = [2, 0, 0], sizes = [1, 8, 8], strides = [1, 1, 1]} : vector<4x8x8xf32> to vector<1x8x8xf32>
    %56 = vector.shape_cast %55 : vector<1x8x8xf32> to vector<8x8xf32>
    %57 = vector.extract_strided_slice %50 {offsets = [3, 0, 0], sizes = [1, 8, 8], strides = [1, 1, 1]} : vector<4x8x8xf32> to vector<1x8x8xf32>
    %58 = vector.shape_cast %57 : vector<1x8x8xf32> to vector<8x8xf32>
    %59 = tpu.concatenate %52, %54, %56, %58 in 1 : vector<8x8xf32>, vector<8x8xf32>, vector<8x8xf32>, vector<8x8xf32> -> vector<8x32xf32>
    %c0_44 = arith.constant 0 : index
    %c0_45 = arith.constant 0 : index
    %60 = vector.load %arg5[%c0_44, %c0_45] : memref<32x32xf32, #tpu.memory_space<vmem>>, vector<32x32xf32>
    %cst_46 = arith.constant dense<0.000000e+00> : vector<8x32xf32>
    %61 = tpu.matmul %59, %60, %cst_46 {dimension_numbers = #tpu.dot_dimension_numbers<[1], [0], [0], [1], [0, 0, 1, 1], [], []>} : vector<8x32xf32>, vector<32x32xf32>, vector<8x32xf32> -> vector<8x32xf32>
    %c0_47 = arith.constant 0 : index
    %c0_48 = arith.constant 0 : index
    %62 = vector.load %arg6[%c0_47, %c0_48] : memref<1x32xf32, #tpu.memory_space<vmem>>, vector<1x32xf32>
    %63 = vector.broadcast %62 : vector<1x32xf32> to vector<8x32xf32>
    %64 = arith.addf %61, %63 : vector<8x32xf32>
    %c0_49 = arith.constant 0 : index
    %c0_50 = arith.constant 0 : index
    %c0_51 = arith.constant 0 : index
    %65 = vector.load %arg7[%c0_49, %c0_50, %c0_51] : memref<1x8x32xf32, #tpu.memory_space<vmem>>, vector<1x8x32xf32>
    %66 = vector.shape_cast %65 : vector<1x8x32xf32> to vector<8x32xf32>
    %67 = vector.shape_cast %64 : vector<8x32xf32> to vector<1x8x32xf32>
    tpu.vector_store %arg7[%c0_49, %c0_50, %c0_51], %67 {strides = array<i32>} : memref<1x8x32xf32, #tpu.memory_space<vmem>>, vector<1x8x32xf32>,
    return
  }
  func.func @transform_0(%arg0: i32, %arg1: i32) -> (i32, i32, i32) {
    %c0_i32 = arith.constant 0 : i32
    %c0_i32_0 = arith.constant 0 : i32
    %c0_i32_1 = arith.constant 0 : i32
    return %arg0, %c0_i32, %c0_i32_0 : i32, i32, i32
  }
  func.func @transform_1(%arg0: i32, %arg1: i32) -> (i32, i32) {
    %c0_i32 = arith.constant 0 : i32
    %c0_i32_0 = arith.constant 0 : i32
    %c0_i32_1 = arith.constant 0 : i32
    return %c0_i32, %c0_i32_0 : i32, i32
  }
  func.func @transform_2(%arg0: i32, %arg1: i32) -> (i32, i32) {
    %c0_i32 = arith.constant 0 : i32
    %c0_i32_0 = arith.constant 0 : i32
    %c0_i32_1 = arith.constant 0 : i32
    return %c0_i32, %c0_i32_0 : i32, i32
  }
  func.func @transform_3(%arg0: i32, %arg1: i32) -> (i32, i32) {
    %c0_i32 = arith.constant 0 : i32
    %c0_i32_0 = arith.constant 0 : i32
    %c0_i32_1 = arith.constant 0 : i32
    return %c0_i32, %c0_i32_0 : i32, i32
  }
  func.func @transform_4(%arg0: i32, %arg1: i32) -> (i32, i32) {
    %c0_i32 = arith.constant 0 : i32
    %c0_i32_0 = arith.constant 0 : i32
    %c0_i32_1 = arith.constant 0 : i32
    return %c0_i32, %c0_i32_0 : i32, i32
  }
  func.func @transform_5(%arg0: i32, %arg1: i32) -> (i32, i32, i32) {
    %c0_i32 = arith.constant 0 : i32
    %c0_i32_0 = arith.constant 0 : i32
    return %arg0, %arg1, %c0_i32 : i32, i32, i32
  }
}

</mosaic_0001>

<llo_original>
// kernel: tpu_custom_call.1
$region0: #{tpu_custom_call.1}
  #allocation0 [shape = 'u32[]', space=smem, size = 0x4, offset = 0x4, fixed_abs, tag = 'smem constant byte address 0x4 - core index']
  #allocation1 [shape = 'u32[72,128]{1,0:T(1,128)}', space=vmem, size = 0x9000, scoped, tag = 'internal scratch']
  #allocation2 [shape = 'f32[4,8,8]{2,1,0:T(8,128)}', space=vmem, size = 0x4000, scoped, tag = 'scratch operand']
  #allocation3 [shape = 'f32[4,8,8]{2,1,0:T(8,128)}', space=vmem, size = 0x4000, scoped, tag = 'scratch operand']
  #allocation4 [shape = 'f32[4,8,8]{2,1,0:T(8,128)}', space=vmem, size = 0x4000, scoped, tag = 'scratch operand']
  #allocation5 [shape = 'f32[4,8,1]{2,1,0:T(8,128)}', space=vmem, size = 0x4000, scoped, tag = 'scratch operand']
  #allocation6 [shape = 'f32[4,8,1]{2,1,0:T(8,128)}', space=vmem, size = 0x4000, scoped, tag = 'scratch operand']
  #allocation7 [shape = 'f32[4,8,8]{2,1,0:T(8,128)}', space=vmem, size = 0x4000, scoped, tag = 'scratch operand']
  %s0 = inlined_call_operand.hbm [shape: f32[2,8,32], index: 0, kind: input, shape index: {}]
  %s1 = inlined_call_operand.hbm [shape: f32[32,32], index: 1, kind: input, shape index: {}]
  %s2 = inlined_call_operand.hbm [shape: f32[32,64], index: 2, kind: input, shape index: {}]
  %s3 = inlined_call_operand.hbm [shape: f32[32,32], index: 3, kind: input, shape index: {}]
  %s4 = inlined_call_operand.vmem [shape: f32[1,32], index: 4, kind: input, shape index: {}]
  %s5 = inlined_call_operand.hbm [shape: f32[2,8,32], index: 5, kind: output, shape index: {}]
  %s6 = sld [smem:[#allocation0]]
  $region80: #{tpu_custom_call.1} parent=0
    _
  %s8 = ssub.s32 1, %s6
  %s9 = scalar_select 0, %s8, %s6
  $region1: #{tpu_custom_call.1} parent=0
    #allocation8 [shape = 'u8[8192]{0}', space=vmem, size = 0x2000, scoped, tag = 'input window, operand 0']
    #allocation9 [shape = 's32[2]{0}', space=sflag, size = 0x8, scoped, tag = 'scoped memory for tpu_custom_call.1']
    #allocation10 [shape = 's32[2]{0}', space=sflag, size = 0x8, scoped, tag = 'scoped memory for tpu_custom_call.1']
    #allocation11 [shape = 'u8[16384]{0}', space=vmem, size = 0x4000, scoped, tag = 'input window, operand 1, single buffered']
    #allocation12 [shape = 's32[1]{0}', space=sflag, size = 0x4, scoped, tag = 'scoped memory for tpu_custom_call.1']
    #allocation13 [shape = 'u8[16384]{0}', space=vmem, size = 0x4000, scoped, tag = 'input window, operand 2, single buffered']
    #allocation14 [shape = 'u8[16384]{0}', space=vmem, size = 0x4000, scoped, tag = 'input window, operand 3, single buffered']
    #allocation15 [shape = 's32[1]{0}', space=sflag, size = 0x4, scoped, tag = 'scoped memory for tpu_custom_call.1']
    #allocation16 [shape = 'u8[8192]{0}', space=vmem, size = 0x2000, scoped, tag = 'output window, operand 0']
    %10 = vsyncpa [#allocation9], 0
    %s11 = scalar_lea.sflag [#allocation9], 1
    %12 = vsyncpa %s11, 0
    %13 = vsyncpa [#allocation12], 0
    %14 = vsyncpa [#allocation15], 0
    %15 = vsyncpa [#allocation10], 0
    %s16 = scalar_lea.sflag [#allocation10], 1
    %17 = vsyncpa %s16, 0
    loop: start=0, step=1, limit=4
    $region2: #{tpu_custom_call.1} parent=1 // loop_pre_header
      _
    $region3: #{tpu_custom_call.1} parent=1 // loop_header
      %s19 = sphi 0, %s23
      %p20 = scmp.ge.s32.totalorder %s19, 4
      %s26 = sphi 0, %s38
      %s27 = sphi 0, %s34
      %s28 = sphi 0, %s26
      %s29 = sphi 0, %s27
      %s30 = sphi 0, %s28
      %s31 = sphi 0, %s29
      %s41 = sphi 0, %s43
      %s44 = sphi 0, %s41
      %s45 = sphi 0, %s44
      %s61 = sphi 0, %s45
      %s65 = sphi 0, %s65
      %s67 = sphi 0, %s65
      %s68 = sphi 0, %s67
      %s82 = sphi 0, %s68
      %s86 = sphi 0, %s86
      %s88 = sphi 0, %s86
      %s89 = sphi 0, %s88
      %s103 = sphi 0, %s89
      %s107 = sphi 0, %s107
      %s109 = sphi 0, %s107
      %s110 = sphi 0, %s109
      %s124 = sphi 0, %s110
      %s128 = sphi 0, %s128
      %s130 = sphi 0, %s128
      %s131 = sphi 0, %s130
      %s145 = sphi 0, %s131
      %s153 = sphi 0, %s155
      %s156 = sphi 0, %s153
      %s157 = sphi 0, %s156
      %s173 = sphi 0, %s157
    $region4: #{tpu_custom_call.1} parent=1 // loop_header_branch
      %22 = sbr.rel (%p20) target = $region8
    $region5: #{tpu_custom_call.1} parent=1 // loop_body
      %s24 = ssub.s32 %s19, 1
      %s25 = ssub.s32 %s19, 2
      %s32 = sadd.s32 1, %s27
      %p33 = scmp.ge.s32.totalorder %s32, 1
      %s34 = scalar_select %p33, 0, %s32
      %s35 = sadd.s32 1, %s26
      %s36 = scalar_select %p33, %s35, %s26
      %p37 = scmp.ge.s32.totalorder %s36, 2
      %s38 = scalar_select %p37, 0, %s36
      %s39 = ssub.s32 %s26, %s38
      %p40 = scmp.eq.s32.totalorder %s39, 0
      %s42 = sadd.s32 %s41, 1
      %s43 = scalar_select %p40, %s41, %s42
      %p46 = pneg %p40
      %p47 = scmp.eq.s32.totalorder %s19, 1
      %p48 = por %p46, %p47
      %p49 = scmp.ne.s32.totalorder %s41, %s44
      %p50 = scmp.eq.s32.totalorder %s19, 0
      %p51 = por %p49, %p50
      %p52 = scmp.ne.s32.totalorder %s41, %s44
      %p53 = scmp.eq.s32.totalorder %s24, 1
      %p54 = por %p52, %p53
      %p55 = scmp.ne.s32.totalorder %s44, %s45
      %p56 = scmp.eq.s32.totalorder %s24, 0
      %p57 = por %p55, %p56
      %p58 = scmp.ne.s32.totalorder %s44, %s45
      %p59 = scmp.eq.s32.totalorder %s25, 1
      %p60 = por %p58, %p59
      %p62 = scmp.ne.s32.totalorder %s45, %s61
      %p63 = scmp.eq.s32.totalorder %s25, 0
      %p64 = por %p62, %p63
      %s66 = sadd.s32 %s65, 1
      %p69 = scmp.eq.s32.totalorder %s19, 1
      %p70 = scmp.ne.s32.totalorder %s65, %s67
      %p71 = scmp.eq.s32.totalorder %s19, 0
      %p72 = por %p70, %p71
      %p73 = scmp.ne.s32.totalorder %s65, %s67
      %p74 = scmp.eq.s32.totalorder %s24, 1
      %p75 = por %p73, %p74
      %p76 = scmp.ne.s32.totalorder %s67, %s68
      %p77 = scmp.eq.s32.totalorder %s24, 0
      %p78 = por %p76, %p77
      %p79 = scmp.ne.s32.totalorder %s67, %s68
      %p80 = scmp.eq.s32.totalorder %s25, 1
      %p81 = por %p79, %p80
      %p83 = scmp.ne.s32.totalorder %s68, %s82
      %p84 = scmp.eq.s32.totalorder %s25, 0
      %p85 = por %p83, %p84
      %s87 = sadd.s32 %s86, 1
      %p90 = scmp.eq.s32.totalorder %s19, 1
      %p91 = scmp.ne.s32.totalorder %s86, %s88
      %p92 = scmp.eq.s32.totalorder %s19, 0
      %p93 = por %p91, %p92
      %p94 = scmp.ne.s32.totalorder %s86, %s88
      %p95 = scmp.eq.s32.totalorder %s24, 1
      %p96 = por %p94, %p95
      %p97 = scmp.ne.s32.totalorder %s88, %s89
      %p98 = scmp.eq.s32.totalorder %s24, 0
      %p99 = por %p97, %p98
      %p100 = scmp.ne.s32.totalorder %s88, %s89
      %p101 = scmp.eq.s32.totalorder %s25, 1
      %p102 = por %p100, %p101
      %p104 = scmp.ne.s32.totalorder %s89, %s103
      %p105 = scmp.eq.s32.totalorder %s25, 0
      %p106 = por %p104, %p105
      %s108 = sadd.s32 %s107, 1
      %p111 = scmp.eq.s32.totalorder %s19, 1
      %p112 = scmp.ne.s32.totalorder %s107, %s109
      %p113 = scmp.eq.s32.totalorder %s19, 0
      %p114 = por %p112, %p113
      %p115 = scmp.ne.s32.totalorder %s107, %s109
      %p116 = scmp.eq.s32.totalorder %s24, 1
      %p117 = por %p115, %p116
      %p118 = scmp.ne.s32.totalorder %s109, %s110
      %p119 = scmp.eq.s32.totalorder %s24, 0
      %p120 = por %p118, %p119
      %p121 = scmp.ne.s32.totalorder %s109, %s110
      %p122 = scmp.eq.s32.totalorder %s25, 1
      %p123 = por %p121, %p122
      %p125 = scmp.ne.s32.totalorder %s110, %s124
      %p126 = scmp.eq.s32.totalorder %s25, 0
      %p127 = por %p125, %p126
      %s129 = sadd.s32 %s128, 1
      %p132 = scmp.eq.s32.totalorder %s19, 1
      %p133 = scmp.ne.s32.totalorder %s128, %s130
      %p134 = scmp.eq.s32.totalorder %s19, 0
      %p135 = por %p133, %p134
      %p136 = scmp.ne.s32.totalorder %s128, %s130
      %p137 = scmp.eq.s32.totalorder %s24, 1
      %p138 = por %p136, %p137
      %p139 = scmp.ne.s32.totalorder %s130, %s131
      %p140 = scmp.eq.s32.totalorder %s24, 0
      %p141 = por %p139, %p140
      %p142 = scmp.ne.s32.totalorder %s130, %s131
      %p143 = scmp.eq.s32.totalorder %s25, 1
      %p144 = por %p142, %p143
      %p146 = scmp.ne.s32.totalorder %s131, %s145
      %p147 = scmp.eq.s32.totalorder %s25, 0
      %p148 = por %p146, %p147
      %s149 = ssub.s32 %s26, %s38
      %s150 = ssub.s32 %s27, %s34
      %s151 = sor.u32 %s149, %s150
      %p152 = scmp.eq.s32.totalorder %s151, 0
      %s154 = sadd.s32 %s153, 1
      %s155 = scalar_select %p152, %s153, %s154
      %p158 = pneg %p152
      %p159 = scmp.eq.s32.totalorder %s19, 1
      %p160 = por %p158, %p159
      %p161 = scmp.ne.s32.totalorder %s153, %s156
      %p162 = scmp.eq.s32.totalorder %s19, 0
      %p163 = por %p161, %p162
      %p164 = scmp.ne.s32.totalorder %s153, %s156
      %p165 = scmp.eq.s32.totalorder %s24, 1
      %p166 = por %p164, %p165
      %p167 = scmp.ne.s32.totalorder %s156, %s157
      %p168 = scmp.eq.s32.totalorder %s24, 0
      %p169 = por %p167, %p168
      %p170 = scmp.ne.s32.totalorder %s156, %s157
      %p171 = scmp.eq.s32.totalorder %s25, 1
      %p172 = por %p170, %p171
      %p174 = scmp.ne.s32.totalorder %s157, %s173
      %p175 = scmp.eq.s32.totalorder %s25, 0
      %p176 = por %p174, %p175
      %p177 = scmp.le.s32.totalorder 1, %s19
      %p178 = scmp.lt.s32.totalorder %s19, 3
      %p179 = pnand %p177, %p178
      %p180 = pneg %p179
      // Predicated region
      $region9: #{tpu_custom_call.1} parent=5 // pred_check
        _
      $region10: #{tpu_custom_call.1} parent=5 // pred_check_branch
        %182 = sbr.rel (%p179) target = $region12
      $region11: #{tpu_custom_call.1} parent=5 // pred_region
        %s183 = ssub.s32 %s19, 1
        // Predicated region
        $region13: #{tpu_custom_call.1} parent=11 // pred_check
          %p184 = pneg %p78
        $region14: #{tpu_custom_call.1} parent=11 // pred_check_branch
          %186 = sbr.rel (%p184) target = $region16
        $region15: #{tpu_custom_call.1} parent=11 // pred_region
          %188 = vsyncadd [#allocation12], 0
          %s189 = sshll.u32 %s1, 4
          %s190 = int_to_ptr.hbm [resolvable:$true] %s189
          %s191 = sshll.u32 [#allocation11], 4
          %s192 = int_to_ptr.vmem [resolvable:$true] %s191
          %197 = dma.hbm_to_vmem [thread:$0]  %s190, 512, %s192, [#allocation12], 128, 128, 8
        $region16: #{tpu_custom_call.1} parent=11 // pred_fallthru
          _
        // Predicated region
        $region17: #{tpu_custom_call.1} parent=11 // pred_check
          %p198 = pneg %p99
        $region18: #{tpu_custom_call.1} parent=11 // pred_check_branch
          %200 = sbr.rel (%p198) target = $region20
        $region19: #{tpu_custom_call.1} parent=11 // pred_region
          %202 = vsyncadd [#allocation12], 0
          %s203 = sshll.u32 %s2, 4
          %s204 = int_to_ptr.hbm [resolvable:$true] %s203
          %s205 = sshll.u32 [#allocation13], 4
          %s206 = int_to_ptr.vmem [resolvable:$true] %s205
          %211 = dma.hbm_to_vmem [thread:$0]  %s204, 512, %s206, [#allocation12], 128, 128, 8
        $region20: #{tpu_custom_call.1} parent=11 // pred_fallthru
          _
        // Predicated region
        $region21: #{tpu_custom_call.1} parent=11 // pred_check
          %p212 = pneg %p120
        $region22: #{tpu_custom_call.1} parent=11 // pred_check_branch
          %214 = sbr.rel (%p212) target = $region24
        $region23: #{tpu_custom_call.1} parent=11 // pred_region
          %216 = vsyncadd [#allocation15], 0
          %s217 = sshll.u32 %s3, 4
          %s218 = int_to_ptr.hbm [resolvable:$true] %s217
          %s219 = sshll.u32 [#allocation14], 4
          %s220 = int_to_ptr.vmem [resolvable:$true] %s219
          %225 = dma.hbm_to_vmem [thread:$0]  %s218, 512, %s220, [#allocation15], 128, 128, 8
        $region24: #{tpu_custom_call.1} parent=11 // pred_fallthru
          _
        // Predicated region
        $region25: #{tpu_custom_call.1} parent=11 // pred_check
          %p226 = pneg %p141
        $region26: #{tpu_custom_call.1} parent=11 // pred_check_branch
          %228 = sbr.rel (%p226) target = $region28
        $region27: #{tpu_custom_call.1} parent=11 // pred_region
          _
        $region28: #{tpu_custom_call.1} parent=11 // pred_fallthru
          _
      $region12: #{tpu_custom_call.1} parent=5 // pred_fallthru
        _
      %p229 = scmp.lt.s32.totalorder %s19, 2
      // Predicated region
      $region29: #{tpu_custom_call.1} parent=5 // pred_check
        %p230 = pneg %p229
      $region30: #{tpu_custom_call.1} parent=5 // pred_check_branch
        %232 = sbr.rel (%p230) target = $region32
      $region31: #{tpu_custom_call.1} parent=5 // pred_region
        // Predicated region
        $region33: #{tpu_custom_call.1} parent=31 // pred_check
          %p233 = pneg %p51
        $region34: #{tpu_custom_call.1} parent=31 // pred_check_branch
          %235 = sbr.rel (%p233) target = $region36
        $region35: #{tpu_custom_call.1} parent=31 // pred_region
          %s236 = sand.u32 %s41, 1
          %s237 = scalar_lea.sflag [#allocation9], %s236
          %s238 = sand.u32 %s41, 1
          %s239 = smul.addr %s238, 8
          %s240 = scalar_lea.vmem [#allocation8], %s239
          %242 = vsyncadd %s237, 0
          %s243 = smul.addr %s26, 8
          %s244 = scalar_lea.hbm %s0, %s243
          %s246 = sshll.u32 %s244, 4
          %s247 = int_to_ptr.hbm [resolvable:$true] %s246
          %s248 = sshll.u32 %s240, 4
          %s249 = int_to_ptr.vmem [resolvable:$true] %s248
          %251 = dma.hbm_to_vmem [thread:$0]  %s247, 128, %s249, %s237
        $region36: #{tpu_custom_call.1} parent=31 // pred_fallthru
          _
      $region32: #{tpu_custom_call.1} parent=5 // pred_fallthru
        _
      %p252 = scmp.le.s32.totalorder 1, %s19
      %p253 = scmp.lt.s32.totalorder %s19, 3
      %p254 = pnand %p252, %p253
      %p255 = pneg %p254
      // Predicated region
      $region37: #{tpu_custom_call.1} parent=5 // pred_check
        _
      $region38: #{tpu_custom_call.1} parent=5 // pred_check_branch
        %257 = sbr.rel (%p254) target = $region40
      $region39: #{tpu_custom_call.1} parent=5 // pred_region
        %s258 = ssub.s32 %s19, 1
        %s259 = sand.u32 %s44, 1
        %s260 = scalar_lea.sflag [#allocation9], %s259
        %s261 = sand.u32 %s44, 1
        %s262 = smul.addr %s261, 8
        %s263 = scalar_lea.vmem [#allocation8], %s262
        // Predicated region
        $region41: #{tpu_custom_call.1} parent=39 // pred_check
          %p264 = pneg %p57
        $region42: #{tpu_custom_call.1} parent=39 // pred_check_branch
          %266 = sbr.rel (%p264) target = $region44
        $region43: #{tpu_custom_call.1} parent=39 // pred_region
          %268 = dma.done %s260, 128
        $region44: #{tpu_custom_call.1} parent=39 // pred_fallthru
          _
        // Predicated region
        $region45: #{tpu_custom_call.1} parent=39 // pred_check
          %p269 = pneg %p78
        $region46: #{tpu_custom_call.1} parent=39 // pred_check_branch
          %271 = sbr.rel (%p269) target = $region48
        $region47: #{tpu_custom_call.1} parent=39 // pred_region
          %273 = dma.done [#allocation12], 512
        $region48: #{tpu_custom_call.1} parent=39 // pred_fallthru
          _
        // Predicated region
        $region49: #{tpu_custom_call.1} parent=39 // pred_check
          %p274 = pneg %p99
        $region50: #{tpu_custom_call.1} parent=39 // pred_check_branch
          %276 = sbr.rel (%p274) target = $region52
        $region51: #{tpu_custom_call.1} parent=39 // pred_region
          %278 = dma.done [#allocation12], 512
        $region52: #{tpu_custom_call.1} parent=39 // pred_fallthru
          _
        // Predicated region
        $region53: #{tpu_custom_call.1} parent=39 // pred_check
          %p279 = pneg %p120
        $region54: #{tpu_custom_call.1} parent=39 // pred_check_branch
          %281 = sbr.rel (%p279) target = $region56
        $region55: #{tpu_custom_call.1} parent=39 // pred_region
          %283 = dma.done [#allocation15], 512
        $region56: #{tpu_custom_call.1} parent=39 // pred_fallthru
          _
        %s284 = sand.u32 %s44, 1
        %s285 = scalar_lea.sflag [#allocation9], %s284
        %s286 = sand.u32 %s44, 1
        %s287 = smul.addr %s286, 8
        %s288 = scalar_lea.vmem [#allocation8], %s287
        %p289 = pneg %p57
        %p290 = pneg %p54
        %p291 = pneg %p78
        %p292 = pneg %p75
        %p293 = pneg %p99
        %p294 = pneg %p96
        %p295 = pneg %p120
        %p296 = pneg %p117
        %p297 = pneg %p141
        %p298 = pneg %p138
        %p299 = pneg %p169
        %p300 = pneg %p166
        %s301 = sand.u32 %s156, 1
        %s302 = scalar_lea.sflag [#allocation10], %s301
        %s303 = sand.u32 %s156, 1
        %s304 = smul.addr %s303, 8
        %s305 = scalar_lea.vmem [#allocation16], %s304
        %p306 = scmp.eq.s32.totalorder %s29, 0
        // Predicated region
        $region57: #{tpu_custom_call.1} parent=39 // pred_check
          %p307 = pneg %p306
        $region58: #{tpu_custom_call.1} parent=39 // pred_check_branch
          %309 = sbr.rel (%p307) target = $region60
        $region59: #{tpu_custom_call.1} parent=39 // pred_region
          %v310 = vld [vmem:[#allocation13] sm:$0xff]
          %v311 = vld [vmem:[#allocation13 + $0x8] sm:$0xff]
          %v312 = vld [vmem:[#allocation13 + $0x10] sm:$0xff]
          %v313 = vld [vmem:[#allocation13 + $0x18] sm:$0xff]
          %v314 = vld [vmem:[%s263] sm:$0xff]
          %vm315 = vcmask 261120
          %v317 = vsel %vm315, %v314, 0
          %319 = vmatpush.msra.mxu0 0.0
          %320 = vmatpush.msra.mxu0 0.0
          %321 = vmatpush.msra.mxu0 0.0
          %322 = vmatpush.msra.mxu0 0.0
          %323 = vmatpush.msra.mxu0 0.0
          %324 = vmatpush.msra.mxu0 0.0
          %325 = vmatpush.msra.mxu0 0.0
          %326 = vmatpush.msra.mxu0 0.0
          %327 = vmatpush.msra.mxu0 0.0
          %328 = vmatpush.msra.mxu0 0.0
          %329 = vmatpush.msra.mxu0 0.0
          %330 = vmatpush.msra.mxu0 0.0
          %331 = vmatpush.msra.mxu0 %v313
          %332 = vmatpush.msra.mxu0 %v312
          %333 = vmatpush.msra.mxu0 %v311
          %334 = vmatpush.msra.mxu0 %v310
          %335 = vmatmul.f32.gmra.mxu0 %v317
          %v336 = vpop.f32.mrf.mxu0
          %v337 = vadd.f32 0.0, %v336
          %338 = vdwg.mxu0
          %vm339 = vcmask 64512
          %340 = vst.msk [vmem:[#allocation2] sm:$0xff] %vm339, %v337
          %342 = vrot.lane.b32.xlu0 %v337, 96
          %v343 = vpop.permute.xlu0 %342
          %345 = vst.msk [vmem:[#allocation3] sm:$0xff] %vm339, %v343
          %346 = vrot.lane.b32.xlu0 %v337, 120
          %v347 = vpop.permute.xlu0 %346
          %s349 = sadd.s32 0, 8
          %s350 = scalar_lea.vmem [#allocation2], %s349
          %351 = vst.msk [vmem:[%s350] sm:$0xff] %vm339, %v347
          %352 = vrot.lane.b32.xlu0 %v337, 88
          %v353 = vpop.permute.xlu0 %352
          %s355 = scalar_lea.vmem [#allocation3], %s349
          %356 = vst.msk [vmem:[%s355] sm:$0xff] %vm339, %v353
          %357 = vrot.lane.b32.xlu0 %v337, 112
          %v358 = vpop.permute.xlu0 %357
          %s360 = sadd.s32 0, 16
          %s361 = scalar_lea.vmem [#allocation2], %s360
          %362 = vst.msk [vmem:[%s361] sm:$0xff] %vm339, %v358
          %363 = vrot.lane.b32.xlu0 %v337, 80
          %v364 = vpop.permute.xlu0 %363
          %s366 = scalar_lea.vmem [#allocation3], %s360
          %367 = vst.msk [vmem:[%s366] sm:$0xff] %vm339, %v364
          %368 = vrot.lane.b32.xlu0 %v337, 104
          %v369 = vpop.permute.xlu0 %368
          %s371 = sadd.s32 0, 24
          %s372 = scalar_lea.vmem [#allocation2], %s371
          %373 = vst.msk [vmem:[%s372] sm:$0xff] %vm339, %v369
          %374 = vrot.lane.b32.xlu0 %v337, 72
          %v375 = vpop.permute.xlu0 %374
          %s377 = scalar_lea.vmem [#allocation3], %s371
          %378 = vst.msk [vmem:[%s377] sm:$0xff] %vm339, %v375
        $region60: #{tpu_custom_call.1} parent=39 // pred_fallthru
          _
        %s379 = smul.u32 %s29, 8
        %s380 = scalar_lea.vmem %s263, %s379 [#allocation8]
        %v381 = vld [vmem:[%s380] sm:$0xff]
        %v382 = vld [vmem:[#allocation11] sm:$0xff]
        %v383 = vld [vmem:[#allocation11 + $0x8] sm:$0xff]
        %v384 = vld [vmem:[#allocation11 + $0x10] sm:$0xff]
        %v385 = vld [vmem:[#allocation11 + $0x18] sm:$0xff]
        %vm386 = vcmask 261120
        %v388 = vsel %vm386, %v381, 0
        %390 = vmatpush.msra.mxu0 0.0
        %391 = vmatpush.msra.mxu0 0.0
        %392 = vmatpush.msra.mxu0 0.0
        %393 = vmatpush.msra.mxu0 0.0
        %394 = vmatpush.msra.mxu0 0.0
        %395 = vmatpush.msra.mxu0 0.0
        %396 = vmatpush.msra.mxu0 0.0
        %397 = vmatpush.msra.mxu0 0.0
        %398 = vmatpush.msra.mxu0 0.0
        %399 = vmatpush.msra.mxu0 0.0
        %400 = vmatpush.msra.mxu0 0.0
        %401 = vmatpush.msra.mxu0 0.0
        %402 = vmatpush.msra.mxu0 %v385
        %403 = vmatpush.msra.mxu0 %v384
        %404 = vmatpush.msra.mxu0 %v383
        %405 = vmatpush.msra.mxu0 %v382
        %406 = vmatmul.f32.gmra.mxu0 %v388
        %v407 = vpop.f32.mrf.mxu0
        %v408 = vadd.f32 0.0, %v407
        %409 = vdwg.mxu0
        %v410 = vmul.f32 %v408, 0.35355338
        %vm411 = vcmask 64512
        %412 = vst.msk [vmem:[#allocation4] sm:$0xff] %vm411, %v410
        %414 = vrot.lane.b32.xlu0 %v410, 120
        %v415 = vpop.permute.xlu0 %414
        %s417 = scalar_lea.vmem [#allocation4], 8
        %418 = vst.msk [vmem:[%s417] sm:$0xff] %vm411, %v415
        %419 = vrot.lane.b32.xlu0 %v410, 112
        %v420 = vpop.permute.xlu0 %419
        %s422 = scalar_lea.vmem [#allocation4], 16
        %423 = vst.msk [vmem:[%s422] sm:$0xff] %vm411, %v420
        %424 = vrot.lane.b32.xlu0 %v410, 104
        %v425 = vpop.permute.xlu0 %424
        %s427 = scalar_lea.vmem [#allocation4], 24
        %428 = vst.msk [vmem:[%s427] sm:$0xff] %vm411, %v425
        %v429 = vld [vmem:[#allocation4] sm:$0xff]
        %v430 = vld [vmem:[#allocation4 + $0x8] sm:$0xff]
        %v431 = vld [vmem:[#allocation4 + $0x10] sm:$0xff]
        %v432 = vld [vmem:[#allocation4 + $0x18] sm:$0xff]
        %vm433 = vcmask 7168
        %434 = vst.msk [vmem:[#allocation5] sm:$0xff] %vm433, -1e+30
        %435 = vst.msk [vmem:[#allocation5 + $0x8] sm:$0xff] %vm433, -1e+30
        %436 = vst.msk [vmem:[#allocation5 + $0x10] sm:$0xff] %vm433, -1e+30
        %437 = vst.msk [vmem:[#allocation5 + $0x18] sm:$0xff] %vm433, -1e+30
        %438 = vst.msk [vmem:[#allocation6] sm:$0xff] %vm433, 0.0
        %439 = vst.msk [vmem:[#allocation6 + $0x8] sm:$0xff] %vm433, 0.0
        %440 = vst.msk [vmem:[#allocation6 + $0x10] sm:$0xff] %vm433, 0.0
        %441 = vst.msk [vmem:[#allocation6 + $0x18] sm:$0xff] %vm433, 0.0
        %442 = vst.msk [vmem:[#allocation7] sm:$0xff] %vm411, 0.0
        %443 = vst.msk [vmem:[#allocation7 + $0x8] sm:$0xff] %vm411, 0.0
        %444 = vst.msk [vmem:[#allocation7 + $0x10] sm:$0xff] %vm411, 0.0
        %445 = vst.msk [vmem:[#allocation7 + $0x18] sm:$0xff] %vm411, 0.0
        %v446 = vlaneseq
        %v447 = vshrl.u32 %v446, 7
        %v448 = vstv %s379
        %v449 = vadd.s32 %v448, %v447
        %s450 = sadd.s32 %s29, 1
        // While loop
        $region61: #{tpu_custom_call.1} parent=39 // loop_pre_header
          _
        $region62: #{tpu_custom_call.1} parent=39 // loop_header
          %s452 = sphi 0, %s454
          %p453 = scmp.ge.s32.totalorder %s452, %s450
        $region63: #{tpu_custom_call.1} parent=39 // loop_header_branch
          %456 = sbr.rel (%p453) target = $region67
        $region64: #{tpu_custom_call.1} parent=39 // loop_body
          %s457 = smul.u32 %s452, 8
          %s458 = scalar_lea.vmem [#allocation2], %s457
          %v459 = vld [vmem:[%s458] sm:$0xff]
          %v460 = vld [vmem:[%s458 + $0x8] sm:$0xff]
          %v461 = vld [vmem:[%s458 + $0x10] sm:$0xff]
          %v462 = vld [vmem:[%s458 + $0x18] sm:$0xff]
          %s463 = scalar_lea.vmem [#allocation3], %s457
          %v464 = vld [vmem:[%s463] sm:$0xff]
          %v465 = vld [vmem:[%s463 + $0x8] sm:$0xff]
          %v466 = vld [vmem:[%s463 + $0x10] sm:$0xff]
          %v467 = vld [vmem:[%s463 + $0x18] sm:$0xff]
          %v469 = vsel %vm411, %v429, 0
          %v472 = vsel %vm411, %v459, 0
          %474 = vmatpush.xpose.msra.mxu0 0.0
          %475 = vmatpush.xpose.msra.mxu0 0.0
          %476 = vmatpush.xpose.msra.mxu0 0.0
          %477 = vmatpush.xpose.msra.mxu0 0.0
          %478 = vmatpush.xpose.msra.mxu0 0.0
          %479 = vmatpush.xpose.msra.mxu0 0.0
          %480 = vmatpush.xpose.msra.mxu0 0.0
          %481 = vmatpush.xpose.msra.mxu0 0.0
          %482 = vmatpush.xpose.msra.mxu0 0.0
          %483 = vmatpush.xpose.msra.mxu0 0.0
          %484 = vmatpush.xpose.msra.mxu0 0.0
          %485 = vmatpush.xpose.msra.mxu0 0.0
          %486 = vmatpush.xpose.msra.mxu0 0.0
          %487 = vmatpush.xpose.msra.mxu0 0.0
          %488 = vmatpush.xpose.msra.mxu0 0.0
          %489 = vmatpush.xpose.msra.mxu0 %v472
          %490 = vmatmul.f32.gmra.mxu0 %v469
          %v491 = vpop.f32.mrf.mxu0
          %v492 = vadd.f32 0.0, %v491
          %493 = vdwg.mxu0
          %v495 = vsel %vm411, %v430, 0
          %v498 = vsel %vm411, %v460, 0
          %500 = vmatpush.xpose.msra.mxu0 0.0
          %501 = vmatpush.xpose.msra.mxu0 0.0
          %502 = vmatpush.xpose.msra.mxu0 0.0
          %503 = vmatpush.xpose.msra.mxu0 0.0
          %504 = vmatpush.xpose.msra.mxu0 0.0
          %505 = vmatpush.xpose.msra.mxu0 0.0
          %506 = vmatpush.xpose.msra.mxu0 0.0
          %507 = vmatpush.xpose.msra.mxu0 0.0
          %508 = vmatpush.xpose.msra.mxu0 0.0
          %509 = vmatpush.xpose.msra.mxu0 0.0
          %510 = vmatpush.xpose.msra.mxu0 0.0
          %511 = vmatpush.xpose.msra.mxu0 0.0
          %512 = vmatpush.xpose.msra.mxu0 0.0
          %513 = vmatpush.xpose.msra.mxu0 0.0
          %514 = vmatpush.xpose.msra.mxu0 0.0
          %515 = vmatpush.xpose.msra.mxu0 %v498
          %516 = vmatmul.f32.gmra.mxu0 %v495
          %v517 = vpop.f32.mrf.mxu0
          %v518 = vadd.f32 0.0, %v517
          %519 = vdwg.mxu0
          %v521 = vsel %vm411, %v431, 0
          %v524 = vsel %vm411, %v461, 0
          %526 = vmatpush.xpose.msra.mxu0 0.0
          %527 = vmatpush.xpose.msra.mxu0 0.0
          %528 = vmatpush.xpose.msra.mxu0 0.0
          %529 = vmatpush.xpose.msra.mxu0 0.0
          %530 = vmatpush.xpose.msra.mxu0 0.0
          %531 = vmatpush.xpose.msra.mxu0 0.0
          %532 = vmatpush.xpose.msra.mxu0 0.0
          %533 = vmatpush.xpose.msra.mxu0 0.0
          %534 = vmatpush.xpose.msra.mxu0 0.0
          %535 = vmatpush.xpose.msra.mxu0 0.0
          %536 = vmatpush.xpose.msra.mxu0 0.0
          %537 = vmatpush.xpose.msra.mxu0 0.0
          %538 = vmatpush.xpose.msra.mxu0 0.0
          %539 = vmatpush.xpose.msra.mxu0 0.0
          %540 = vmatpush.xpose.msra.mxu0 0.0
          %541 = vmatpush.xpose.msra.mxu0 %v524
          %542 = vmatmul.f32.gmra.mxu0 %v521
          %v543 = vpop.f32.mrf.mxu0
          %v544 = vadd.f32 0.0, %v543
          %545 = vdwg.mxu0
          %v547 = vsel %vm411, %v432, 0
          %v550 = vsel %vm411, %v462, 0
          %552 = vmatpush.xpose.msra.mxu0 0.0
          %553 = vmatpush.xpose.msra.mxu0 0.0
          %554 = vmatpush.xpose.msra.mxu0 0.0
          %555 = vmatpush.xpose.msra.mxu0 0.0
          %556 = vmatpush.xpose.msra.mxu0 0.0
          %557 = vmatpush.xpose.msra.mxu0 0.0
          %558 = vmatpush.xpose.msra.mxu0 0.0
          %559 = vmatpush.xpose.msra.mxu0 0.0
          %560 = vmatpush.xpose.msra.mxu0 0.0
          %561 = vmatpush.xpose.msra.mxu0 0.0
          %562 = vmatpush.xpose.msra.mxu0 0.0
          %563 = vmatpush.xpose.msra.mxu0 0.0
          %564 = vmatpush.xpose.msra.mxu0 0.0
          %565 = vmatpush.xpose.msra.mxu0 0.0
          %566 = vmatpush.xpose.msra.mxu0 0.0
          %567 = vmatpush.xpose.msra.mxu0 %v550
          %568 = vmatmul.f32.gmra.mxu0 %v547
          %v569 = vpop.f32.mrf.mxu0
          %v570 = vadd.f32 0.0, %v569
          %571 = vdwg.mxu0
          %v572 = vlaneseq
          %v573 = vand.u32 %v572, 127
          %v574 = vstv %s457
          %v575 = vadd.s32 %v574, %v573
          %vm576 = vcmp.le.s32.totalorder %v575, %v449
          %v577 = vsel %vm576, 1, 0
          %vm578 = vcmp.eq.s32.totalorder %v577, 1
          %v579 = vsel %vm578, %v492, -1e+30
          %v580 = vsel %vm578, %v518, -1e+30
          %v581 = vsel %vm578, %v544, -1e+30
          %v582 = vsel %vm578, %v570, -1e+30
          %v583 = vld [vmem:[#allocation5] sm:$0xff]
          %v584 = vld [vmem:[#allocation5 + $0x8] sm:$0xff]
          %v585 = vld [vmem:[#allocation5 + $0x10] sm:$0xff]
          %v586 = vld [vmem:[#allocation5 + $0x18] sm:$0xff]
          %v587 = vsel %vm411, %v579, -inf
          %588 = vmax.xlane.f32.xlu0 %v587
          %v589 = vpop.xlane.xlu0 %588
          %v590 = vsel %vm411, %v580, -inf
          %591 = vmax.xlane.f32.xlu0 %v590
          %v592 = vpop.xlane.xlu0 %591
          %v593 = vsel %vm411, %v581, -inf
          %594 = vmax.xlane.f32.xlu0 %v593
          %v595 = vpop.xlane.xlu0 %594
          %v596 = vsel %vm411, %v582, -inf
          %597 = vmax.xlane.f32.xlu0 %v596
          %v598 = vpop.xlane.xlu0 %597
          %v599 = vmax.f32 %v583, %v589
          %v600 = vmax.f32 %v584, %v592
          %v601 = vmax.f32 %v585, %v595
          %v602 = vmax.f32 %v586, %v598
          %v603 = vsub.f32 %v583, %v599
          %v604 = vsub.f32 %v584, %v600
          %v605 = vsub.f32 %v585, %v601
          %v606 = vsub.f32 %v586, %v602
          %v607 = vmul.f32 %v603, 1.442695
          %v608 = vpow.pop %v607
          %v609 = vmul.f32 %v604, 1.442695
          %v610 = vpow.pop %v609
          %v611 = vmul.f32 %v605, 1.442695
          %v612 = vpow.pop %v611
          %v613 = vmul.f32 %v606, 1.442695
          %v614 = vpow.pop %v613
          %616 = vset.pattern.permute.xlu0 0
          %617 = vperm.xlu0 %616, %v599
          %v618 = vpop.permute.xlu0 %617
          %621 = vset.pattern.permute.xlu0 0
          %622 = vperm.xlu0 %621, %v600
          %v623 = vpop.permute.xlu0 %622
          %626 = vset.pattern.permute.xlu0 0
          %627 = vperm.xlu0 %626, %v601
          %v628 = vpop.permute.xlu0 %627
          %631 = vset.pattern.permute.xlu0 0
          %632 = vperm.xlu0 %631, %v602
          %v633 = vpop.permute.xlu0 %632
          %v635 = vsub.f32 %v579, %v618
          %v636 = vsub.f32 %v580, %v623
          %v637 = vsub.f32 %v581, %v628
          %v638 = vsub.f32 %v582, %v633
          %v639 = vmul.f32 %v635, 1.442695
          %v640 = vpow.pop %v639
          %v641 = vmul.f32 %v636, 1.442695
          %v642 = vpow.pop %v641
          %v643 = vmul.f32 %v637, 1.442695
          %v644 = vpow.pop %v643
          %v645 = vmul.f32 %v638, 1.442695
          %v646 = vpow.pop %v645
          %v647 = vld [vmem:[#allocation6] sm:$0xff]
          %v648 = vld [vmem:[#allocation6 + $0x8] sm:$0xff]
          %v649 = vld [vmem:[#allocation6 + $0x10] sm:$0xff]
          %v650 = vld [vmem:[#allocation6 + $0x18] sm:$0xff]
          %v651 = vmul.f32 %v608, %v647
          %v652 = vmul.f32 %v610, %v648
          %v653 = vmul.f32 %v612, %v649
          %v654 = vmul.f32 %v614, %v650
          %v655 = vsel %vm411, %v640, 0.0
          %656 = vadd.xlane.f32.xlu0 %v655
          %v657 = vpop.xlane.xlu0 %656
          %v658 = vsel %vm411, %v642, 0.0
          %659 = vadd.xlane.f32.xlu0 %v658
          %v660 = vpop.xlane.xlu0 %659
          %v661 = vsel %vm411, %v644, 0.0
          %662 = vadd.xlane.f32.xlu0 %v661
          %v663 = vpop.xlane.xlu0 %662
          %v664 = vsel %vm411, %v646, 0.0
          %665 = vadd.xlane.f32.xlu0 %v664
          %v666 = vpop.xlane.xlu0 %665
          %v667 = vadd.f32 %v651, %v657
          %v668 = vadd.f32 %v652, %v660
          %v669 = vadd.f32 %v653, %v663
          %v670 = vadd.f32 %v654, %v666
          %671 = vst.msk [vmem:[#allocation6] sm:$0xff] %vm433, %v667
          %672 = vst.msk [vmem:[#allocation6 + $0x8] sm:$0xff] %vm433, %v668
          %673 = vst.msk [vmem:[#allocation6 + $0x10] sm:$0xff] %vm433, %v669
          %674 = vst.msk [vmem:[#allocation6 + $0x18] sm:$0xff] %vm433, %v670
          %v675 = vld [vmem:[#allocation7] sm:$0xff]
          %v676 = vld [vmem:[#allocation7 + $0x8] sm:$0xff]
          %v677 = vld [vmem:[#allocation7 + $0x10] sm:$0xff]
          %v678 = vld [vmem:[#allocation7 + $0x18] sm:$0xff]
          %680 = vset.pattern.permute.xlu0 0
          %681 = vperm.xlu0 %680, %v608
          %v682 = vpop.permute.xlu0 %681
          %685 = vset.pattern.permute.xlu0 0
          %686 = vperm.xlu0 %685, %v610
          %v687 = vpop.permute.xlu0 %686
          %690 = vset.pattern.permute.xlu0 0
          %691 = vperm.xlu0 %690, %v612
          %v692 = vpop.permute.xlu0 %691
          %695 = vset.pattern.permute.xlu0 0
          %696 = vperm.xlu0 %695, %v614
          %v697 = vpop.permute.xlu0 %696
          %v699 = vmul.f32 %v682, %v675
          %v700 = vmul.f32 %v687, %v676
          %v701 = vmul.f32 %v692, %v677
          %v702 = vmul.f32 %v697, %v678
          %v704 = vsel %vm411, %v640, 0
          %706 = vmatpush.msra.mxu0 0.0
          %707 = vmatpush.msra.mxu0 0.0
          %708 = vmatpush.msra.mxu0 0.0
          %709 = vmatpush.msra.mxu0 0.0
          %710 = vmatpush.msra.mxu0 0.0
          %711 = vmatpush.msra.mxu0 0.0
          %712 = vmatpush.msra.mxu0 0.0
          %713 = vmatpush.msra.mxu0 0.0
          %714 = vmatpush.msra.mxu0 0.0
          %715 = vmatpush.msra.mxu0 0.0
          %716 = vmatpush.msra.mxu0 0.0
          %717 = vmatpush.msra.mxu0 0.0
          %718 = vmatpush.msra.mxu0 0.0
          %719 = vmatpush.msra.mxu0 0.0
          %720 = vmatpush.msra.mxu0 0.0
          %721 = vmatpush.msra.mxu0 %v464
          %722 = vmatmul.f32.gmra.mxu0 %v704
          %v723 = vpop.f32.mrf.mxu0
          %v724 = vadd.f32 0.0, %v723
          %725 = vdwg.mxu0
          %v727 = vsel %vm411, %v642, 0
          %729 = vmatpush.msra.mxu0 0.0
          %730 = vmatpush.msra.mxu0 0.0
          %731 = vmatpush.msra.mxu0 0.0
          %732 = vmatpush.msra.mxu0 0.0
          %733 = vmatpush.msra.mxu0 0.0
          %734 = vmatpush.msra.mxu0 0.0
          %735 = vmatpush.msra.mxu0 0.0
          %736 = vmatpush.msra.mxu0 0.0
          %737 = vmatpush.msra.mxu0 0.0
          %738 = vmatpush.msra.mxu0 0.0
          %739 = vmatpush.msra.mxu0 0.0
          %740 = vmatpush.msra.mxu0 0.0
          %741 = vmatpush.msra.mxu0 0.0
          %742 = vmatpush.msra.mxu0 0.0
          %743 = vmatpush.msra.mxu0 0.0
          %744 = vmatpush.msra.mxu0 %v465
          %745 = vmatmul.f32.gmra.mxu0 %v727
          %v746 = vpop.f32.mrf.mxu0
          %v747 = vadd.f32 0.0, %v746
          %748 = vdwg.mxu0
          %v750 = vsel %vm411, %v644, 0
          %752 = vmatpush.msra.mxu0 0.0
          %753 = vmatpush.msra.mxu0 0.0
          %754 = vmatpush.msra.mxu0 0.0
          %755 = vmatpush.msra.mxu0 0.0
          %756 = vmatpush.msra.mxu0 0.0
          %757 = vmatpush.msra.mxu0 0.0
          %758 = vmatpush.msra.mxu0 0.0
          %759 = vmatpush.msra.mxu0 0.0
          %760 = vmatpush.msra.mxu0 0.0
          %761 = vmatpush.msra.mxu0 0.0
          %762 = vmatpush.msra.mxu0 0.0
          %763 = vmatpush.msra.mxu0 0.0
          %764 = vmatpush.msra.mxu0 0.0
          %765 = vmatpush.msra.mxu0 0.0
          %766 = vmatpush.msra.mxu0 0.0
          %767 = vmatpush.msra.mxu0 %v466
          %768 = vmatmul.f32.gmra.mxu0 %v750
          %v769 = vpop.f32.mrf.mxu0
          %v770 = vadd.f32 0.0, %v769
          %771 = vdwg.mxu0
          %v773 = vsel %vm411, %v646, 0
          %775 = vmatpush.msra.mxu0 0.0
          %776 = vmatpush.msra.mxu0 0.0
          %777 = vmatpush.msra.mxu0 0.0
          %778 = vmatpush.msra.mxu0 0.0
          %779 = vmatpush.msra.mxu0 0.0
          %780 = vmatpush.msra.mxu0 0.0
          %781 = vmatpush.msra.mxu0 0.0
          %782 = vmatpush.msra.mxu0 0.0
          %783 = vmatpush.msra.mxu0 0.0
          %784 = vmatpush.msra.mxu0 0.0
          %785 = vmatpush.msra.mxu0 0.0
          %786 = vmatpush.msra.mxu0 0.0
          %787 = vmatpush.msra.mxu0 0.0
          %788 = vmatpush.msra.mxu0 0.0
          %789 = vmatpush.msra.mxu0 0.0
          %790 = vmatpush.msra.mxu0 %v467
          %791 = vmatmul.f32.gmra.mxu0 %v773
          %v792 = vpop.f32.mrf.mxu0
          %v793 = vadd.f32 0.0, %v792
          %794 = vdwg.mxu0
          %v795 = vadd.f32 %v699, %v724
          %v796 = vadd.f32 %v700, %v747
          %v797 = vadd.f32 %v701, %v770
          %v798 = vadd.f32 %v702, %v793
          %799 = vst.msk [vmem:[#allocation7] sm:$0xff] %vm411, %v795
          %800 = vst.msk [vmem:[#allocation7 + $0x8] sm:$0xff] %vm411, %v796
          %801 = vst.msk [vmem:[#allocation7 + $0x10] sm:$0xff] %vm411, %v797
          %802 = vst.msk [vmem:[#allocation7 + $0x18] sm:$0xff] %vm411, %v798
          %803 = vst.msk [vmem:[#allocation5] sm:$0xff] %vm433, %v599
          %804 = vst.msk [vmem:[#allocation5 + $0x8] sm:$0xff] %vm433, %v600
          %805 = vst.msk [vmem:[#allocation5 + $0x10] sm:$0xff] %vm433, %v601
          %806 = vst.msk [vmem:[#allocation5 + $0x18] sm:$0xff] %vm433, %v602
        $region65: #{tpu_custom_call.1} parent=39 // loop_footer
          %s454 = sadd.s32 %s452, 1
        $region66: #{tpu_custom_call.1} parent=39 // loop_footer_branch
          %451 = sbr.rel target = $region62
        $region67: #{tpu_custom_call.1} parent=39 // loop_exit
          _
        %v807 = vld [vmem:[#allocation7] sm:$0xff]
        %v808 = vld [vmem:[#allocation7 + $0x8] sm:$0xff]
        %v809 = vld [vmem:[#allocation7 + $0x10] sm:$0xff]
        %v810 = vld [vmem:[#allocation7 + $0x18] sm:$0xff]
        %v811 = vld [vmem:[#allocation6] sm:$0xff]
        %v812 = vld [vmem:[#allocation6 + $0x8] sm:$0xff]
        %v813 = vld [vmem:[#allocation6 + $0x10] sm:$0xff]
        %v814 = vld [vmem:[#allocation6 + $0x18] sm:$0xff]
        %v815 = vrcp.pop %v811
        %v816 = vrcp.pop %v812
        %v817 = vrcp.pop %v813
        %v818 = vrcp.pop %v814
        %820 = vset.pattern.permute.xlu0 0
        %821 = vperm.xlu0 %820, %v815
        %v822 = vpop.permute.xlu0 %821
        %825 = vset.pattern.permute.xlu0 0
        %826 = vperm.xlu0 %825, %v816
        %v827 = vpop.permute.xlu0 %826
        %830 = vset.pattern.permute.xlu0 0
        %831 = vperm.xlu0 %830, %v817
        %v832 = vpop.permute.xlu0 %831
        %835 = vset.pattern.permute.xlu0 0
        %836 = vperm.xlu0 %835, %v818
        %v837 = vpop.permute.xlu0 %836
        %v839 = vmul.f32 %v807, %v822
        %v840 = vmul.f32 %v808, %v827
        %v841 = vmul.f32 %v809, %v832
        %v842 = vmul.f32 %v810, %v837
        %844 = vrot.lane.b32.xlu0 %v840, 8
        %v845 = vpop.permute.xlu0 %844
        %848 = vrot.lane.b32.xlu0 %v841, 16
        %v849 = vpop.permute.xlu0 %848
        %852 = vrot.lane.b32.xlu0 %v842, 24
        %v853 = vpop.permute.xlu0 %852
        %v855 = vsel %vm411, %v839, %v845
        %vm856 = vcmask 130048
        %v857 = vsel %vm856, %v855, %v849
        %vm858 = vcmask 195584
        %v859 = vsel %vm858, %v857, %v853
        %v860 = vld [vmem:[#allocation14] sm:$0xff]
        %v861 = vld [vmem:[#allocation14 + $0x8] sm:$0xff]
        %v862 = vld [vmem:[#allocation14 + $0x10] sm:$0xff]
        %v863 = vld [vmem:[#allocation14 + $0x18] sm:$0xff]
        %v864 = vld [vmem:[%s4] sm:$0x1]
        %v866 = vperm.slane %v864, 0
        %v869 = vsel %vm386, %v859, 0
        %871 = vmatpush.msra.mxu0 0.0
        %872 = vmatpush.msra.mxu0 0.0
        %873 = vmatpush.msra.mxu0 0.0
        %874 = vmatpush.msra.mxu0 0.0
        %875 = vmatpush.msra.mxu0 0.0
        %876 = vmatpush.msra.mxu0 0.0
        %877 = vmatpush.msra.mxu0 0.0
        %878 = vmatpush.msra.mxu0 0.0
        %879 = vmatpush.msra.mxu0 0.0
        %880 = vmatpush.msra.mxu0 0.0
        %881 = vmatpush.msra.mxu0 0.0
        %882 = vmatpush.msra.mxu0 0.0
        %883 = vmatpush.msra.mxu0 %v863
        %884 = vmatpush.msra.mxu0 %v862
        %885 = vmatpush.msra.mxu0 %v861
        %886 = vmatpush.msra.mxu0 %v860
        %887 = vmatmul.f32.gmra.mxu0 %v869
        %v888 = vpop.f32.mrf.mxu0
        %v889 = vadd.f32 %v866, %v888
        %890 = vdwg.mxu0
        %891 = vst.msk [vmem:[%s305] sm:$0xff] %vm386, %v889
        %s892 = sand.u32 %s156, 1
        %s893 = scalar_lea.sflag [#allocation10], %s892
        %s894 = sand.u32 %s156, 1
        %s895 = smul.addr %s894, 8
        %s896 = scalar_lea.vmem [#allocation16], %s895
        // Predicated region
        $region68: #{tpu_custom_call.1} parent=39 // pred_check
          %p897 = pneg %p166
        $region69: #{tpu_custom_call.1} parent=39 // pred_check_branch
          %899 = sbr.rel (%p897) target = $region71
        $region70: #{tpu_custom_call.1} parent=39 // pred_region
          %901 = vsyncadd %s893, 0
          %s902 = sadd.s32 %s29, %s28
          %s903 = smul.addr %s902, 8
          %s904 = scalar_lea.hbm %s5, %s903
          %s906 = sshll.u32 %s896, 4
          %s907 = int_to_ptr.vmem [resolvable:$true] %s906
          %s908 = sshll.u32 %s904, 4
          %s909 = int_to_ptr.hbm [resolvable:$true] %s908
          %911 = dma.vmem_to_hbm [thread:$0]  %s907, 128, %s909, %s893
        $region71: #{tpu_custom_call.1} parent=39 // pred_fallthru
          _
      $region40: #{tpu_custom_call.1} parent=5 // pred_fallthru
        _
      %p912 = scmp.le.s32.totalorder 2, %s19
      // Predicated region
      $region72: #{tpu_custom_call.1} parent=5 // pred_check
        %p913 = pneg %p912
      $region73: #{tpu_custom_call.1} parent=5 // pred_check_branch
        %915 = sbr.rel (%p913) target = $region75
      $region74: #{tpu_custom_call.1} parent=5 // pred_region
        %s916 = ssub.s32 %s19, 2
        // Predicated region
        $region76: #{tpu_custom_call.1} parent=74 // pred_check
          %p917 = pneg %p172
        $region77: #{tpu_custom_call.1} parent=74 // pred_check_branch
          %919 = sbr.rel (%p917) target = $region79
        $region78: #{tpu_custom_call.1} parent=74 // pred_region
          %s920 = sand.u32 %s157, 1
          %s921 = scalar_lea.sflag [#allocation10], %s920
          %s922 = sand.u32 %s157, 1
          %s923 = smul.addr %s922, 8
          %s924 = scalar_lea.vmem [#allocation16], %s923
          %926 = dma.done %s921, 128
        $region79: #{tpu_custom_call.1} parent=74 // pred_fallthru
          _
      $region75: #{tpu_custom_call.1} parent=5 // pred_fallthru
        _
    $region6: #{tpu_custom_call.1} parent=1 // loop_footer
      %s23 = sadd.s32 1, %s19
    $region7: #{tpu_custom_call.1} parent=1 // loop_footer_branch
      %18 = sbr.rel target = $region3
    $region8: #{tpu_custom_call.1} parent=1 // loop_exit
      _
    %927 = vsyncpa [#allocation9], 1
    %s928 = scalar_lea.sflag [#allocation9], 1
    %929 = vsyncpa %s928, 1
    %930 = vsyncpa [#allocation12], 1
    %931 = vsyncpa [#allocation15], 1
    %932 = vsyncpa [#allocation10], 1
    %s933 = scalar_lea.sflag [#allocation10], 1
    %934 = vsyncpa %s933, 1

// kernel: tpu_custom_call.1
$region0: #{tpu_custom_call.1}
  #allocation0 [shape = 'u32[]', space=smem, size = 0x4, offset = 0x4, fixed_abs, tag = 'smem constant byte address 0x4 - core index']
  #allocation1 [shape = 'u32[72,128]{1,0:T(1,128)}', space=vmem, size = 0x9000, scoped, tag = 'internal scratch']
  #allocation2 [shape = 'f32[4,8,8]{2,1,0:T(8,128)}', space=vmem, size = 0x4000, scoped, tag = 'scratch operand']
  #allocation3 [shape = 'f32[4,8,8]{2,1,0:T(8,128)}', space=vmem, size = 0x4000, scoped, tag = 'scratch operand']
  #allocation4 [shape = 'f32[4,8,8]{2,1,0:T(8,128)}', space=vmem, size = 0x4000, scoped, tag = 'scratch operand']
  #allocation5 [shape = 'f32[4,8,1]{2,1,0:T(8,128)}', space=vmem, size = 0x4000, scoped, tag = 'scratch operand']
  #allocation6 [shape = 'f32[4,8,1]{2,1,0:T(8,128)}', space=vmem, size = 0x4000, scoped, tag = 'scratch operand']
  #allocation7 [shape = 'f32[4,8,8]{2,1,0:T(8,128)}', space=vmem, size = 0x4000, scoped, tag = 'scratch operand']
  %s0 = inlined_call_operand.hbm [shape: f32[2,8,32], index: 0, kind: input, shape index: {}]
  %s1 = inlined_call_operand.hbm [shape: f32[32,32], index: 1, kind: input, shape index: {}]
  %s2 = inlined_call_operand.hbm [shape: f32[32,64], index: 2, kind: input, shape index: {}]
  %s3 = inlined_call_operand.hbm [shape: f32[32,32], index: 3, kind: input, shape index: {}]
  %s4 = inlined_call_operand.vmem [shape: f32[1,32], index: 4, kind: input, shape index: {}]
  %s5 = inlined_call_operand.hbm [shape: f32[2,8,32], index: 5, kind: output, shape index: {}]
  %s6 = sld [smem:[#allocation0]]
  $region80: #{tpu_custom_call.1} parent=0
    _
  %s8 = ssub.s32 1, %s6
  %s9 = scalar_select 0, %s8, %s6
  $region1: #{tpu_custom_call.1} parent=0
    #allocation8 [shape = 'u8[8192]{0}', space=vmem, size = 0x2000, scoped, tag = 'input window, operand 0']
    #allocation9 [shape = 's32[2]{0}', space=sflag, size = 0x8, scoped, tag = 'scoped memory for tpu_custom_call.1']
    #allocation10 [shape = 's32[2]{0}', space=sflag, size = 0x8, scoped, tag = 'scoped memory for tpu_custom_call.1']
    #allocation11 [shape = 'u8[16384]{0}', space=vmem, size = 0x4000, scoped, tag = 'input window, operand 1, single buffered']
    #allocation12 [shape = 's32[1]{0}', space=sflag, size = 0x4, scoped, tag = 'scoped memory for tpu_custom_call.1']
    #allocation13 [shape = 'u8[16384]{0}', space=vmem, size = 0x4000, scoped, tag = 'input window, operand 2, single buffered']
    #allocation14 [shape = 'u8[16384]{0}', space=vmem, size = 0x4000, scoped, tag = 'input window, operand 3, single buffered']
    #allocation15 [shape = 's32[1]{0}', space=sflag, size = 0x4, scoped, tag = 'scoped memory for tpu_custom_call.1']
    #allocation16 [shape = 'u8[8192]{0}', space=vmem, size = 0x2000, scoped, tag = 'output window, operand 0']
    %10 = vsyncpa [#allocation9], 0
    %s11 = scalar_lea.sflag [#allocation9], 1
    %12 = vsyncpa %s11, 0
    %13 = vsyncpa [#allocation12], 0
    %14 = vsyncpa [#allocation15], 0
    %15 = vsyncpa [#allocation10], 0
    %s16 = scalar_lea.sflag [#allocation10], 1
    %17 = vsyncpa %s16, 0
    loop: start=0, step=1, limit=4
    $region2: #{tpu_custom_call.1} parent=1 // loop_pre_header
      _
    $region3: #{tpu_custom_call.1} parent=1 // loop_header
      %s19 = sphi 0, %s23
      %p20 = scmp.ge.s32.totalorder %s19, 4
      %s26 = sphi 0, %s38
      %s27 = sphi 0, %s34
      %s28 = sphi 0, %s26
      %s29 = sphi 0, %s27
      %s30 = sphi 0, %s28
      %s31 = sphi 0, %s29
      %s41 = sphi 0, %s43
      %s44 = sphi 0, %s41
      %s45 = sphi 0, %s44
      %s61 = sphi 0, %s45
      %s65 = sphi 0, %s65
      %s67 = sphi 0, %s65
      %s68 = sphi 0, %s67
      %s82 = sphi 0, %s68
      %s86 = sphi 0, %s86
      %s88 = sphi 0, %s86
      %s89 = sphi 0, %s88
      %s103 = sphi 0, %s89
      %s107 = sphi 0, %s107
      %s109 = sphi 0, %s107
      %s110 = sphi 0, %s109
      %s124 = sphi 0, %s110
      %s128 = sphi 0, %s128
      %s130 = sphi 0, %s128
      %s131 = sphi 0, %s130
      %s145 = sphi 0, %s131
      %s153 = sphi 0, %s155
      %s156 = sphi 0, %s153
      %s157 = sphi 0, %s156
      %s173 = sphi 0, %s157
    $region4: #{tpu_custom_call.1} parent=1 // loop_header_branch
      %22 = sbr.rel (%p20) target = $region8
    $region5: #{tpu_custom_call.1} parent=1 // loop_body
      %s24 = ssub.s32 %s19, 1
      %s25 = ssub.s32 %s19, 2
      %s32 = sadd.s32 1, %s27
      %p33 = scmp.ge.s32.totalorder %s32, 1
      %s34 = scalar_select %p33, 0, %s32
      %s35 = sadd.s32 1, %s26
      %s36 = scalar_select %p33, %s35, %s26
      %p37 = scmp.ge.s32.totalorder %s36, 2
      %s38 = scalar_select %p37, 0, %s36
      %s39 = ssub.s32 %s26, %s38
      %p40 = scmp.eq.s32.totalorder %s39, 0
      %s42 = sadd.s32 %s41, 1
      %s43 = scalar_select %p40, %s41, %s42
      %p46 = pneg %p40
      %p47 = scmp.eq.s32.totalorder %s19, 1
      %p48 = por %p46, %p47
      %p49 = scmp.ne.s32.totalorder %s41, %s44
      %p50 = scmp.eq.s32.totalorder %s19, 0
      %p51 = por %p49, %p50
      %p52 = scmp.ne.s32.totalorder %s41, %s44
      %p53 = scmp.eq.s32.totalorder %s24, 1
      %p54 = por %p52, %p53
      %p55 = scmp.ne.s32.totalorder %s44, %s45
      %p56 = scmp.eq.s32.totalorder %s24, 0
      %p57 = por %p55, %p56
      %p58 = scmp.ne.s32.totalorder %s44, %s45
      %p59 = scmp.eq.s32.totalorder %s25, 1
      %p60 = por %p58, %p59
      %p62 = scmp.ne.s32.totalorder %s45, %s61
      %p63 = scmp.eq.s32.totalorder %s25, 0
      %p64 = por %p62, %p63
      %s66 = sadd.s32 %s65, 1
      %p69 = scmp.eq.s32.totalorder %s19, 1
      %p70 = scmp.ne.s32.totalorder %s65, %s67
      %p71 = scmp.eq.s32.totalorder %s19, 0
      %p72 = por %p70, %p71
      %p73 = scmp.ne.s32.totalorder %s65, %s67
      %p74 = scmp.eq.s32.totalorder %s24, 1
      %p75 = por %p73, %p74
      %p76 = scmp.ne.s32.totalorder %s67, %s68
      %p77 = scmp.eq.s32.totalorder %s24, 0
      %p78 = por %p76, %p77
      %p79 = scmp.ne.s32.totalorder %s67, %s68
      %p80 = scmp.eq.s32.totalorder %s25, 1
      %p81 = por %p79, %p80
      %p83 = scmp.ne.s32.totalorder %s68, %s82
      %p84 = scmp.eq.s32.totalorder %s25, 0
      %p85 = por %p83, %p84
      %s87 = sadd.s32 %s86, 1
      %p90 = scmp.eq.s32.totalorder %s19, 1
      %p91 = scmp.ne.s32.totalorder %s86, %s88
      %p92 = scmp.eq.s32.totalorder %s19, 0
      %p93 = por %p91, %p92
      %p94 = scmp.ne.s32.totalorder %s86, %s88
      %p95 = scmp.eq.s32.totalorder %s24, 1
      %p96 = por %p94, %p95
      %p97 = scmp.ne.s32.totalorder %s88, %s89
      %p98 = scmp.eq.s32.totalorder %s24, 0
      %p99 = por %p97, %p98
      %p100 = scmp.ne.s32.totalorder %s88, %s89
      %p101 = scmp.eq.s32.totalorder %s25, 1
      %p102 = por %p100, %p101
      %p104 = scmp.ne.s32.totalorder %s89, %s103
      %p105 = scmp.eq.s32.totalorder %s25, 0
      %p106 = por %p104, %p105
      %s108 = sadd.s32 %s107, 1
      %p111 = scmp.eq.s32.totalorder %s19, 1
      %p112 = scmp.ne.s32.totalorder %s107, %s109
      %p113 = scmp.eq.s32.totalorder %s19, 0
      %p114 = por %p112, %p113
      %p115 = scmp.ne.s32.totalorder %s107, %s109
      %p116 = scmp.eq.s32.totalorder %s24, 1
      %p117 = por %p115, %p116
      %p118 = scmp.ne.s32.totalorder %s109, %s110
      %p119 = scmp.eq.s32.totalorder %s24, 0
      %p120 = por %p118, %p119
      %p121 = scmp.ne.s32.totalorder %s109, %s110
      %p122 = scmp.eq.s32.totalorder %s25, 1
      %p123 = por %p121, %p122
      %p125 = scmp.ne.s32.totalorder %s110, %s124
      %p126 = scmp.eq.s32.totalorder %s25, 0
      %p127 = por %p125, %p126
      %s129 = sadd.s32 %s128, 1
      %p132 = scmp.eq.s32.totalorder %s19, 1
      %p133 = scmp.ne.s32.totalorder %s128, %s130
      %p134 = scmp.eq.s32.totalorder %s19, 0
      %p135 = por %p133, %p134
      %p136 = scmp.ne.s32.totalorder %s128, %s130
      %p137 = scmp.eq.s32.totalorder %s24, 1
      %p138 = por %p136, %p137
      %p139 = scmp.ne.s32.totalorder %s130, %s131
      %p140 = scmp.eq.s32.totalorder %s24, 0
      %p141 = por %p139, %p140
      %p142 = scmp.ne.s32.totalorder %s130, %s131
      %p143 = scmp.eq.s32.totalorder %s25, 1
      %p144 = por %p142, %p143
      %p146 = scmp.ne.s32.totalorder %s131, %s145
      %p147 = scmp.eq.s32.totalorder %s25, 0
      %p148 = por %p146, %p147
      %s149 = ssub.s32 %s26, %s38
      %s150 = ssub.s32 %s27, %s34
      %s151 = sor.u32 %s149, %s150
      %p152 = scmp.eq.s32.totalorder %s151, 0
      %s154 = sadd.s32 %s153, 1
      %s155 = scalar_select %p152, %s153, %s154
      %p158 = pneg %p152
      %p159 = scmp.eq.s32.totalorder %s19, 1
      %p160 = por %p158, %p159
      %p161 = scmp.ne.s32.totalorder %s153, %s156
      %p162 = scmp.eq.s32.totalorder %s19, 0
      %p163 = por %p161, %p162
      %p164 = scmp.ne.s32.totalorder %s153, %s156
      %p165 = scmp.eq.s32.totalorder %s24, 1
      %p166 = por %p164, %p165
      %p167 = scmp.ne.s32.totalorder %s156, %s157
      %p168 = scmp.eq.s32.totalorder %s24, 0
      %p169 = por %p167, %p168
      %p170 = scmp.ne.s32.totalorder %s156, %s157
      %p171 = scmp.eq.s32.totalorder %s25, 1
      %p172 = por %p170, %p171
      %p174 = scmp.ne.s32.totalorder %s157, %s173
      %p175 = scmp.eq.s32.totalorder %s25, 0
      %p176 = por %p174, %p175
      %p177 = scmp.le.s32.totalorder 1, %s19
      %p178 = scmp.lt.s32.totalorder %s19, 3
      %p179 = pnand %p177, %p178
      %p180 = pneg %p179
      // Predicated region
      $region9: #{tpu_custom_call.1} parent=5 // pred_check
        _
      $region10: #{tpu_custom_call.1} parent=5 // pred_check_branch
        %182 = sbr.rel (%p179) target = $region12
      $region11: #{tpu_custom_call.1} parent=5 // pred_region
        %s183 = ssub.s32 %s19, 1
        // Predicated region
        $region13: #{tpu_custom_call.1} parent=11 // pred_check
          %p184 = pneg %p78
        $region14: #{tpu_custom_call.1} parent=11 // pred_check_branch
          %186 = sbr.rel (%p184) target = $region16
        $region15: #{tpu_custom_call.1} parent=11 // pred_region
          %188 = vsyncadd [#allocation12], 0
          %s189 = sshll.u32 %s1, 4
          %s190 = int_to_ptr.hbm [resolvable:$true] %s189
          %s191 = sshll.u32 [#allocation11], 4
          %s192 = int_to_ptr.vmem [resolvable:$true] %s191
          %197 = dma.hbm_to_vmem [thread:$0]  %s190, 512, %s192, [#allocation12], 128, 128, 8
        $region16: #{tpu_custom_call.1} parent=11 // pred_fallthru
          _
        // Predicated region
        $region17: #{tpu_custom_call.1} parent=11 // pred_check
          %p198 = pneg %p99
        $region18: #{tpu_custom_call.1} parent=11 // pred_check_branch
          %200 = sbr.rel (%p198) target = $region20
        $region19: #{tpu_custom_call.1} parent=11 // pred_region
          %202 = vsyncadd [#allocation12], 0
          %s203 = sshll.u32 %s2, 4
          %s204 = int_to_ptr.hbm [resolvable:$true] %s203
          %s205 = sshll.u32 [#allocation13], 4
          %s206 = int_to_ptr.vmem [resolvable:$true] %s205
          %211 = dma.hbm_to_vmem [thread:$0]  %s204, 512, %s206, [#allocation12], 128, 128, 8
        $region20: #{tpu_custom_call.1} parent=11 // pred_fallthru
          _
        // Predicated region
        $region21: #{tpu_custom_call.1} parent=11 // pred_check
          %p212 = pneg %p120
        $region22: #{tpu_custom_call.1} parent=11 // pred_check_branch
          %214 = sbr.rel (%p212) target = $region24
        $region23: #{tpu_custom_call.1} parent=11 // pred_region
          %216 = vsyncadd [#allocation15], 0
          %s217 = sshll.u32 %s3, 4
          %s218 = int_to_ptr.hbm [resolvable:$true] %s217
          %s219 = sshll.u32 [#allocation14], 4
          %s220 = int_to_ptr.vmem [resolvable:$true] %s219
          %225 = dma.hbm_to_vmem [thread:$0]  %s218, 512, %s220, [#allocation15], 128, 128, 8
        $region24: #{tpu_custom_call.1} parent=11 // pred_fallthru
          _
        // Predicated region
        $region25: #{tpu_custom_call.1} parent=11 // pred_check
          %p226 = pneg %p141
        $region26: #{tpu_custom_call.1} parent=11 // pred_check_branch
          %228 = sbr.rel (%p226) target = $region28
        $region27: #{tpu_custom_call.1} parent=11 // pred_region
          _
        $region28: #{tpu_custom_call.1} parent=11 // pred_fallthru
          _
      $region12: #{tpu_custom_call.1} parent=5 // pred_fallthru
        _
      %p229 = scmp.lt.s32.totalorder %s19, 2
      // Predicated region
      $region29: #{tpu_custom_call.1} parent=5 // pred_check
        %p230 = pneg %p229
      $region30: #{tpu_custom_call.1} parent=5 // pred_check_branch
        %232 = sbr.rel (%p230) target = $region32
      $region31: #{tpu_custom_call.1} parent=5 // pred_region
        // Predicated region
        $region33: #{tpu_custom_call.1} parent=31 // pred_check
          %p233 = pneg %p51
        $region34: #{tpu_custom_call.1} parent=31 // pred_check_branch
          %235 = sbr.rel (%p233) target = $region36
        $region35: #{tpu_custom_call.1} parent=31 // pred_region
          %s236 = sand.u32 %s41, 1
          %s237 = scalar_lea.sflag [#allocation9], %s236
          %s238 = sand.u32 %s41, 1
          %s239 = smul.addr %s238, 8
          %s240 = scalar_lea.vmem [#allocation8], %s239
          %242 = vsyncadd %s237, 0
          %s243 = smul.addr %s26, 8
          %s244 = scalar_lea.hbm %s0, %s243
          %s246 = sshll.u32 %s244, 4
          %s247 = int_to_ptr.hbm [resolvable:$true] %s246
          %s248 = sshll.u32 %s240, 4
          %s249 = int_to_ptr.vmem [resolvable:$true] %s248
          %251 = dma.hbm_to_vmem [thread:$0]  %s247, 128, %s249, %s237
        $region36: #{tpu_custom_call.1} parent=31 // pred_fallthru
          _
      $region32: #{tpu_custom_call.1} parent=5 // pred_fallthru
        _
      %p252 = scmp.le.s32.totalorder 1, %s19
      %p253 = scmp.lt.s32.totalorder %s19, 3
      %p254 = pnand %p252, %p253
      %p255 = pneg %p254
      // Predicated region
      $region37: #{tpu_custom_call.1} parent=5 // pred_check
        _
      $region38: #{tpu_custom_call.1} parent=5 // pred_check_branch
        %257 = sbr.rel (%p254) target = $region40
      $region39: #{tpu_custom_call.1} parent=5 // pred_region
        %s258 = ssub.s32 %s19, 1
        %s259 = sand.u32 %s44, 1
        %s260 = scalar_lea.sflag [#allocation9], %s259
        %s261 = sand.u32 %s44, 1
        %s262 = smul.addr %s261, 8
        %s263 = scalar_lea.vmem [#allocation8], %s262
        // Predicated region
        $region41: #{tpu_custom_call.1} parent=39 // pred_check
          %p264 = pneg %p57
        $region42: #{tpu_custom_call.1} parent=39 // pred_check_branch
          %266 = sbr.rel (%p264) target = $region44
        $region43: #{tpu_custom_call.1} parent=39 // pred_region
          %268 = dma.done %s260, 128
        $region44: #{tpu_custom_call.1} parent=39 // pred_fallthru
          _
        // Predicated region
        $region45: #{tpu_custom_call.1} parent=39 // pred_check
          %p269 = pneg %p78
        $region46: #{tpu_custom_call.1} parent=39 // pred_check_branch
          %271 = sbr.rel (%p269) target = $region48
        $region47: #{tpu_custom_call.1} parent=39 // pred_region
          %273 = dma.done [#allocation12], 512
        $region48: #{tpu_custom_call.1} parent=39 // pred_fallthru
          _
        // Predicated region
        $region49: #{tpu_custom_call.1} parent=39 // pred_check
          %p274 = pneg %p99
        $region50: #{tpu_custom_call.1} parent=39 // pred_check_branch
          %276 = sbr.rel (%p274) target = $region52
        $region51: #{tpu_custom_call.1} parent=39 // pred_region
          %278 = dma.done [#allocation12], 512
        $region52: #{tpu_custom_call.1} parent=39 // pred_fallthru
          _
        // Predicated region
        $region53: #{tpu_custom_call.1} parent=39 // pred_check
          %p279 = pneg %p120
        $region54: #{tpu_custom_call.1} parent=39 // pred_check_branch
          %281 = sbr.rel (%p279) target = $region56
        $region55: #{tpu_custom_call.1} parent=39 // pred_region
          %283 = dma.done [#allocation15], 512
        $region56: #{tpu_custom_call.1} parent=39 // pred_fallthru
          _
        %s284 = sand.u32 %s44, 1
        %s285 = scalar_lea.sflag [#allocation9], %s284
        %s286 = sand.u32 %s44, 1
        %s287 = smul.addr %s286, 8
        %s288 = scalar_lea.vmem [#allocation8], %s287
        %p289 = pneg %p57
        %p290 = pneg %p54
        %p291 = pneg %p78
        %p292 = pneg %p75
        %p293 = pneg %p99
        %p294 = pneg %p96
        %p295 = pneg %p120
        %p296 = pneg %p117
        %p297 = pneg %p141
        %p298 = pneg %p138
        %p299 = pneg %p169
        %p300 = pneg %p166
        %s301 = sand.u32 %s156, 1
        %s302 = scalar_lea.sflag [#allocation10], %s301
        %s303 = sand.u32 %s156, 1
        %s304 = smul.addr %s303, 8
        %s305 = scalar_lea.vmem [#allocation16], %s304
        %p306 = scmp.eq.s32.totalorder %s29, 0
        // Predicated region
        $region57: #{tpu_custom_call.1} parent=39 // pred_check
          %p307 = pneg %p306
        $region58: #{tpu_custom_call.1} parent=39 // pred_check_branch
          %309 = sbr.rel (%p307) target = $region60
        $region59: #{tpu_custom_call.1} parent=39 // pred_region
          %v310 = vld [vmem:[#allocation13] sm:$0xff]
          %v311 = vld [vmem:[#allocation13 + $0x8] sm:$0xff]
          %v312 = vld [vmem:[#allocation13 + $0x10] sm:$0xff]
          %v313 = vld [vmem:[#allocation13 + $0x18] sm:$0xff]
          %v314 = vld [vmem:[%s263] sm:$0xff]
          %vm315 = vcmask 261120
          %v317 = vsel %vm315, %v314, 0
          %319 = vmatpush.msra.mxu0 0.0
          %320 = vmatpush.msra.mxu0 0.0
          %321 = vmatpush.msra.mxu0 0.0
          %322 = vmatpush.msra.mxu0 0.0
          %323 = vmatpush.msra.mxu0 0.0
          %324 = vmatpush.msra.mxu0 0.0
          %325 = vmatpush.msra.mxu0 0.0
          %326 = vmatpush.msra.mxu0 0.0
          %327 = vmatpush.msra.mxu0 0.0
          %328 = vmatpush.msra.mxu0 0.0
          %329 = vmatpush.msra.mxu0 0.0
          %330 = vmatpush.msra.mxu0 0.0
          %331 = vmatpush.msra.mxu0 %v313
          %332 = vmatpush.msra.mxu0 %v312
          %333 = vmatpush.msra.mxu0 %v311
          %334 = vmatpush.msra.mxu0 %v310
          %335 = vmatmul.f32.gmra.mxu0 %v317
          %v336 = vpop.f32.mrf.mxu0
          %v337 = vadd.f32 0.0, %v336
          %338 = vdwg.mxu0
          %vm339 = vcmask 64512
          %340 = vst.msk [vmem:[#allocation2] sm:$0xff] %vm339, %v337
          %342 = vrot.lane.b32.xlu0 %v337, 96
          %v343 = vpop.permute.xlu0 %342
          %345 = vst.msk [vmem:[#allocation3] sm:$0xff] %vm339, %v343
          %346 = vrot.lane.b32.xlu0 %v337, 120
          %v347 = vpop.permute.xlu0 %346
          %s349 = sadd.s32 0, 8
          %s350 = scalar_lea.vmem [#allocation2], %s349
          %351 = vst.msk [vmem:[%s350] sm:$0xff] %vm339, %v347
          %352 = vrot.lane.b32.xlu0 %v337, 88
          %v353 = vpop.permute.xlu0 %352
          %s355 = scalar_lea.vmem [#allocation3], %s349
          %356 = vst.msk [vmem:[%s355] sm:$0xff] %vm339, %v353
          %357 = vrot.lane.b32.xlu0 %v337, 112
          %v358 = vpop.permute.xlu0 %357
          %s360 = sadd.s32 0, 16
          %s361 = scalar_lea.vmem [#allocation2], %s360
          %362 = vst.msk [vmem:[%s361] sm:$0xff] %vm339, %v358
          %363 = vrot.lane.b32.xlu0 %v337, 80
          %v364 = vpop.permute.xlu0 %363
          %s366 = scalar_lea.vmem [#allocation3], %s360
          %367 = vst.msk [vmem:[%s366] sm:$0xff] %vm339, %v364
          %368 = vrot.lane.b32.xlu0 %v337, 104
          %v369 = vpop.permute.xlu0 %368
          %s371 = sadd.s32 0, 24
          %s372 = scalar_lea.vmem [#allocation2], %s371
          %373 = vst.msk [vmem:[%s372] sm:$0xff] %vm339, %v369
          %374 = vrot.lane.b32.xlu0 %v337, 72
          %v375 = vpop.permute.xlu0 %374
          %s377 = scalar_lea.vmem [#allocation3], %s371
          %378 = vst.msk [vmem:[%s377] sm:$0xff] %vm339, %v375
        $region60: #{tpu_custom_call.1} parent=39 // pred_fallthru
          _
        %s379 = smul.u32 %s29, 8
        %s380 = scalar_lea.vmem %s263, %s379 [#allocation8]
        %v381 = vld [vmem:[%s380] sm:$0xff]
        %v382 = vld [vmem:[#allocation11] sm:$0xff]
        %v383 = vld [vmem:[#allocation11 + $0x8] sm:$0xff]
        %v384 = vld [vmem:[#allocation11 + $0x10] sm:$0xff]
        %v385 = vld [vmem:[#allocation11 + $0x18] sm:$0xff]
        %vm386 = vcmask 261120
        %v388 = vsel %vm386, %v381, 0
        %390 = vmatpush.msra.mxu0 0.0
        %391 = vmatpush.msra.mxu0 0.0
        %392 = vmatpush.msra.mxu0 0.0
        %393 = vmatpush.msra.mxu0 0.0
        %394 = vmatpush.msra.mxu0 0.0
        %395 = vmatpush.msra.mxu0 0.0
        %396 = vmatpush.msra.mxu0 0.0
        %397 = vmatpush.msra.mxu0 0.0
        %398 = vmatpush.msra.mxu0 0.0
        %399 = vmatpush.msra.mxu0 0.0
        %400 = vmatpush.msra.mxu0 0.0
        %401 = vmatpush.msra.mxu0 0.0
        %402 = vmatpush.msra.mxu0 %v385
        %403 = vmatpush.msra.mxu0 %v384
        %404 = vmatpush.msra.mxu0 %v383
        %405 = vmatpush.msra.mxu0 %v382
        %406 = vmatmul.f32.gmra.mxu0 %v388
        %v407 = vpop.f32.mrf.mxu0
        %v408 = vadd.f32 0.0, %v407
        %409 = vdwg.mxu0
        %v410 = vmul.f32 %v408, 0.35355338
        %vm411 = vcmask 64512
        %412 = vst.msk [vmem:[#allocation4] sm:$0xff] %vm411, %v410
        %414 = vrot.lane.b32.xlu0 %v410, 120
        %v415 = vpop.permute.xlu0 %414
        %s417 = scalar_lea.vmem [#allocation4], 8
        %418 = vst.msk [vmem:[%s417] sm:$0xff] %vm411, %v415
        %419 = vrot.lane.b32.xlu0 %v410, 112
        %v420 = vpop.permute.xlu0 %419
        %s422 = scalar_lea.vmem [#allocation4], 16
        %423 = vst.msk [vmem:[%s422] sm:$0xff] %vm411, %v420
        %424 = vrot.lane.b32.xlu0 %v410, 104
        %v425 = vpop.permute.xlu0 %424
        %s427 = scalar_lea.vmem [#allocation4], 24
        %428 = vst.msk [vmem:[%s427] sm:$0xff] %vm411, %v425
        %v429 = vld [vmem:[#allocation4] sm:$0xff]
        %v430 = vld [vmem:[#allocation4 + $0x8] sm:$0xff]
        %v431 = vld [vmem:[#allocation4 + $0x10] sm:$0xff]
        %v432 = vld [vmem:[#allocation4 + $0x18] sm:$0xff]
        %vm433 = vcmask 7168
        %434 = vst.msk [vmem:[#allocation5] sm:$0xff] %vm433, -1e+30
        %435 = vst.msk [vmem:[#allocation5 + $0x8] sm:$0xff] %vm433, -1e+30
        %436 = vst.msk [vmem:[#allocation5 + $0x10] sm:$0xff] %vm433, -1e+30
        %437 = vst.msk [vmem:[#allocation5 + $0x18] sm:$0xff] %vm433, -1e+30
        %438 = vst.msk [vmem:[#allocation6] sm:$0xff] %vm433, 0.0
        %439 = vst.msk [vmem:[#allocation6 + $0x8] sm:$0xff] %vm433, 0.0
        %440 = vst.msk [vmem:[#allocation6 + $0x10] sm:$0xff] %vm433, 0.0
        %441 = vst.msk [vmem:[#allocation6 + $0x18] sm:$0xff] %vm433, 0.0
        %442 = vst.msk [vmem:[#allocation7] sm:$0xff] %vm411, 0.0
        %443 = vst.msk [vmem:[#allocation7 + $0x8] sm:$0xff] %vm411, 0.0
        %444 = vst.msk [vmem:[#allocation7 + $0x10] sm:$0xff] %vm411, 0.0
        %445 = vst.msk [vmem:[#allocation7 + $0x18] sm:$0xff] %vm411, 0.0
        %v446 = vlaneseq
        %v447 = vshrl.u32 %v446, 7
        %v448 = vstv %s379
        %v449 = vadd.s32 %v448, %v447
        %s450 = sadd.s32 %s29, 1
        // While loop
        $region61: #{tpu_custom_call.1} parent=39 // loop_pre_header
          _
        $region62: #{tpu_custom_call.1} parent=39 // loop_header
          %s452 = sphi 0, %s454
          %p453 = scmp.ge.s32.totalorder %s452, %s450
        $region63: #{tpu_custom_call.1} parent=39 // loop_header_branch
          %456 = sbr.rel (%p453) target = $region67
        $region64: #{tpu_custom_call.1} parent=39 // loop_body
          %s457 = smul.u32 %s452, 8
          %s458 = scalar_lea.vmem [#allocation2], %s457
          %v459 = vld [vmem:[%s458] sm:$0xff]
          %v460 = vld [vmem:[%s458 + $0x8] sm:$0xff]
          %v461 = vld [vmem:[%s458 + $0x10] sm:$0xff]
          %v462 = vld [vmem:[%s458 + $0x18] sm:$0xff]
          %s463 = scalar_lea.vmem [#allocation3], %s457
          %v464 = vld [vmem:[%s463] sm:$0xff]
          %v465 = vld [vmem:[%s463 + $0x8] sm:$0xff]
          %v466 = vld [vmem:[%s463 + $0x10] sm:$0xff]
          %v467 = vld [vmem:[%s463 + $0x18] sm:$0xff]
          %v469 = vsel %vm411, %v429, 0
          %v472 = vsel %vm411, %v459, 0
          %474 = vmatpush.xpose.msra.mxu0 0.0
          %475 = vmatpush.xpose.msra.mxu0 0.0
          %476 = vmatpush.xpose.msra.mxu0 0.0
          %477 = vmatpush.xpose.msra.mxu0 0.0
          %478 = vmatpush.xpose.msra.mxu0 0.0
          %479 = vmatpush.xpose.msra.mxu0 0.0
          %480 = vmatpush.xpose.msra.mxu0 0.0
          %481 = vmatpush.xpose.msra.mxu0 0.0
          %482 = vmatpush.xpose.msra.mxu0 0.0
          %483 = vmatpush.xpose.msra.mxu0 0.0
          %484 = vmatpush.xpose.msra.mxu0 0.0
          %485 = vmatpush.xpose.msra.mxu0 0.0
          %486 = vmatpush.xpose.msra.mxu0 0.0
          %487 = vmatpush.xpose.msra.mxu0 0.0
          %488 = vmatpush.xpose.msra.mxu0 0.0
          %489 = vmatpush.xpose.msra.mxu0 %v472
          %490 = vmatmul.f32.gmra.mxu0 %v469
          %v491 = vpop.f32.mrf.mxu0
          %v492 = vadd.f32 0.0, %v491
          %493 = vdwg.mxu0
          %v495 = vsel %vm411, %v430, 0
          %v498 = vsel %vm411, %v460, 0
          %500 = vmatpush.xpose.msra.mxu0 0.0
          %501 = vmatpush.xpose.msra.mxu0 0.0
          %502 = vmatpush.xpose.msra.mxu0 0.0
          %503 = vmatpush.xpose.msra.mxu0 0.0
          %504 = vmatpush.xpose.msra.mxu0 0.0
          %505 = vmatpush.xpose.msra.mxu0 0.0
          %506 = vmatpush.xpose.msra.mxu0 0.0
          %507 = vmatpush.xpose.msra.mxu0 0.0
          %508 = vmatpush.xpose.msra.mxu0 0.0
          %509 = vmatpush.xpose.msra.mxu0 0.0
          %510 = vmatpush.xpose.msra.mxu0 0.0
          %511 = vmatpush.xpose.msra.mxu0 0.0
          %512 = vmatpush.xpose.msra.mxu0 0.0
          %513 = vmatpush.xpose.msra.mxu0 0.0
          %514 = vmatpush.xpose.msra.mxu0 0.0
          %515 = vmatpush.xpose.msra.mxu0 %v498
          %516 = vmatmul.f32.gmra.mxu0 %v495
          %v517 = vpop.f32.mrf.mxu0
          %v518 = vadd.f32 0.0, %v517
          %519 = vdwg.mxu0
          %v521 = vsel %vm411, %v431, 0
          %v524 = vsel %vm411, %v461, 0
          %526 = vmatpush.xpose.msra.mxu0 0.0
          %527 = vmatpush.xpose.msra.mxu0 0.0
          %528 = vmatpush.xpose.msra.mxu0 0.0
          %529 = vmatpush.xpose.msra.mxu0 0.0
          %530 = vmatpush.xpose.msra.mxu0 0.0
          %531 = vmatpush.xpose.msra.mxu0 0.0
          %532 = vmatpush.xpose.msra.mxu0 0.0
          %533 = vmatpush.xpose.msra.mxu0 0.0
          %534 = vmatpush.xpose.msra.mxu0 0.0
          %535 = vmatpush.xpose.msra.mxu0 0.0
          %536 = vmatpush.xpose.msra.mxu0 0.0
          %537 = vmatpush.xpose.msra.mxu0 0.0
          %538 = vmatpush.xpose.msra.mxu0 0.0
          %539 = vmatpush.xpose.msra.mxu0 0.0
          %540 = vmatpush.xpose.msra.mxu0 0.0
          %541 = vmatpush.xpose.msra.mxu0 %v524
          %542 = vmatmul.f32.gmra.mxu0 %v521
          %v543 = vpop.f32.mrf.mxu0
          %v544 = vadd.f32 0.0, %v543
          %545 = vdwg.mxu0
          %v547 = vsel %vm411, %v432, 0
          %v550 = vsel %vm411, %v462, 0
          %552 = vmatpush.xpose.msra.mxu0 0.0
          %553 = vmatpush.xpose.msra.mxu0 0.0
          %554 = vmatpush.xpose.msra.mxu0 0.0
          %555 = vmatpush.xpose.msra.mxu0 0.0
          %556 = vmatpush.xpose.msra.mxu0 0.0
          %557 = vmatpush.xpose.msra.mxu0 0.0
          %558 = vmatpush.xpose.msra.mxu0 0.0
          %559 = vmatpush.xpose.msra.mxu0 0.0
          %560 = vmatpush.xpose.msra.mxu0 0.0
          %561 = vmatpush.xpose.msra.mxu0 0.0
          %562 = vmatpush.xpose.msra.mxu0 0.0
          %563 = vmatpush.xpose.msra.mxu0 0.0
          %564 = vmatpush.xpose.msra.mxu0 0.0
          %565 = vmatpush.xpose.msra.mxu0 0.0
          %566 = vmatpush.xpose.msra.mxu0 0.0
          %567 = vmatpush.xpose.msra.mxu0 %v550
          %568 = vmatmul.f32.gmra.mxu0 %v547
          %v569 = vpop.f32.mrf.mxu0
          %v570 = vadd.f32 0.0, %v569
          %571 = vdwg.mxu0
          %v572 = vlaneseq
          %v573 = vand.u32 %v572, 127
          %v574 = vstv %s457
          %v575 = vadd.s32 %v574, %v573
          %vm576 = vcmp.le.s32.totalorder %v575, %v449
          %v577 = vsel %vm576, 1, 0
          %vm578 = vcmp.eq.s32.totalorder %v577, 1
          %v579 = vsel %vm578, %v492, -1e+30
          %v580 = vsel %vm578, %v518, -1e+30
          %v581 = vsel %vm578, %v544, -1e+30
          %v582 = vsel %vm578, %v570, -1e+30
          %v583 = vld [vmem:[#allocation5] sm:$0xff]
          %v584 = vld [vmem:[#allocation5 + $0x8] sm:$0xff]
          %v585 = vld [vmem:[#allocation5 + $0x10] sm:$0xff]
          %v586 = vld [vmem:[#allocation5 + $0x18] sm:$0xff]
          %v587 = vsel %vm411, %v579, -inf
          %588 = vmax.xlane.f32.xlu0 %v587
          %v589 = vpop.xlane.xlu0 %588
          %v590 = vsel %vm411, %v580, -inf
          %591 = vmax.xlane.f32.xlu0 %v590
          %v592 = vpop.xlane.xlu0 %591
          %v593 = vsel %vm411, %v581, -inf
          %594 = vmax.xlane.f32.xlu0 %v593
          %v595 = vpop.xlane.xlu0 %594
          %v596 = vsel %vm411, %v582, -inf
          %597 = vmax.xlane.f32.xlu0 %v596
          %v598 = vpop.xlane.xlu0 %597
          %v599 = vmax.f32 %v583, %v589
          %v600 = vmax.f32 %v584, %v592
          %v601 = vmax.f32 %v585, %v595
          %v602 = vmax.f32 %v586, %v598
          %v603 = vsub.f32 %v583, %v599
          %v604 = vsub.f32 %v584, %v600
          %v605 = vsub.f32 %v585, %v601
          %v606 = vsub.f32 %v586, %v602
          %v607 = vmul.f32 %v603, 1.442695
          %v608 = vpow.pop %v607
          %v609 = vmul.f32 %v604, 1.442695
          %v610 = vpow.pop %v609
          %v611 = vmul.f32 %v605, 1.442695
          %v612 = vpow.pop %v611
          %v613 = vmul.f32 %v606, 1.442695
          %v614 = vpow.pop %v613
          %616 = vset.pattern.permute.xlu0 0
          %617 = vperm.xlu0 %616, %v599
          %v618 = vpop.permute.xlu0 %617
          %621 = vset.pattern.permute.xlu0 0
          %622 = vperm.xlu0 %621, %v600
          %v623 = vpop.permute.xlu0 %622
          %626 = vset.pattern.permute.xlu0 0
          %627 = vperm.xlu0 %626, %v601
          %v628 = vpop.permute.xlu0 %627
          %631 = vset.pattern.permute.xlu0 0
          %632 = vperm.xlu0 %631, %v602
          %v633 = vpop.permute.xlu0 %632
          %v635 = vsub.f32 %v579, %v618
          %v636 = vsub.f32 %v580, %v623
          %v637 = vsub.f32 %v581, %v628
          %v638 = vsub.f32 %v582, %v633
          %v639 = vmul.f32 %v635, 1.442695
          %v640 = vpow.pop %v639
          %v641 = vmul.f32 %v636, 1.442695
          %v642 = vpow.pop %v641
          %v643 = vmul.f32 %v637, 1.442695
          %v644 = vpow.pop %v643
          %v645 = vmul.f32 %v638, 1.442695
          %v646 = vpow.pop %v645
          %v647 = vld [vmem:[#allocation6] sm:$0xff]
          %v648 = vld [vmem:[#allocation6 + $0x8] sm:$0xff]
          %v649 = vld [vmem:[#allocation6 + $0x10] sm:$0xff]
          %v650 = vld [vmem:[#allocation6 + $0x18] sm:$0xff]
          %v651 = vmul.f32 %v608, %v647
          %v652 = vmul.f32 %v610, %v648
          %v653 = vmul.f32 %v612, %v649
          %v654 = vmul.f32 %v614, %v650
          %v655 = vsel %vm411, %v640, 0.0
          %656 = vadd.xlane.f32.xlu0 %v655
          %v657 = vpop.xlane.xlu0 %656
          %v658 = vsel %vm411, %v642, 0.0
          %659 = vadd.xlane.f32.xlu0 %v658
          %v660 = vpop.xlane.xlu0 %659
          %v661 = vsel %vm411, %v644, 0.0
          %662 = vadd.xlane.f32.xlu0 %v661
          %v663 = vpop.xlane.xlu0 %662
          %v664 = vsel %vm411, %v646, 0.0
          %665 = vadd.xlane.f32.xlu0 %v664
          %v666 = vpop.xlane.xlu0 %665
          %v667 = vadd.f32 %v651, %v657
          %v668 = vadd.f32 %v652, %v660
          %v669 = vadd.f32 %v653, %v663
          %v670 = vadd.f32 %v654, %v666
          %671 = vst.msk [vmem:[#allocation6] sm:$0xff] %vm433, %v667
          %672 = vst.msk [vmem:[#allocation6 + $0x8] sm:$0xff] %vm433, %v668
          %673 = vst.msk [vmem:[#allocation6 + $0x10] sm:$0xff] %vm433, %v669
          %674 = vst.msk [vmem:[#allocation6 + $0x18] sm:$0xff] %vm433, %v670
          %v675 = vld [vmem:[#allocation7] sm:$0xff]
          %v676 = vld [vmem:[#allocation7 + $0x8] sm:$0xff]
          %v677 = vld [vmem:[#allocation7 + $0x10] sm:$0xff]
          %v678 = vld [vmem:[#allocation7 + $0x18] sm:$0xff]
          %680 = vset.pattern.permute.xlu0 0
          %681 = vperm.xlu0 %680, %v608
          %v682 = vpop.permute.xlu0 %681
          %685 = vset.pattern.permute.xlu0 0
          %686 = vperm.xlu0 %685, %v610
          %v687 = vpop.permute.xlu0 %686
          %690 = vset.pattern.permute.xlu0 0
          %691 = vperm.xlu0 %690, %v612
          %v692 = vpop.permute.xlu0 %691
          %695 = vset.pattern.permute.xlu0 0
          %696 = vperm.xlu0 %695, %v614
          %v697 = vpop.permute.xlu0 %696
          %v699 = vmul.f32 %v682, %v675
          %v700 = vmul.f32 %v687, %v676
          %v701 = vmul.f32 %v692, %v677
          %v702 = vmul.f32 %v697, %v678
          %v704 = vsel %vm411, %v640, 0
          %706 = vmatpush.msra.mxu0 0.0
          %707 = vmatpush.msra.mxu0 0.0
          %708 = vmatpush.msra.mxu0 0.0
          %709 = vmatpush.msra.mxu0 0.0
          %710 = vmatpush.msra.mxu0 0.0
          %711 = vmatpush.msra.mxu0 0.0
          %712 = vmatpush.msra.mxu0 0.0
          %713 = vmatpush.msra.mxu0 0.0
          %714 = vmatpush.msra.mxu0 0.0
          %715 = vmatpush.msra.mxu0 0.0
          %716 = vmatpush.msra.mxu0 0.0
          %717 = vmatpush.msra.mxu0 0.0
          %718 = vmatpush.msra.mxu0 0.0
          %719 = vmatpush.msra.mxu0 0.0
          %720 = vmatpush.msra.mxu0 0.0
          %721 = vmatpush.msra.mxu0 %v464
          %722 = vmatmul.f32.gmra.mxu0 %v704
          %v723 = vpop.f32.mrf.mxu0
          %v724 = vadd.f32 0.0, %v723
          %725 = vdwg.mxu0
          %v727 = vsel %vm411, %v642, 0
          %729 = vmatpush.msra.mxu0 0.0
          %730 = vmatpush.msra.mxu0 0.0
          %731 = vmatpush.msra.mxu0 0.0
          %732 = vmatpush.msra.mxu0 0.0
          %733 = vmatpush.msra.mxu0 0.0
          %734 = vmatpush.msra.mxu0 0.0
          %735 = vmatpush.msra.mxu0 0.0
          %736 = vmatpush.msra.mxu0 0.0
          %737 = vmatpush.msra.mxu0 0.0
          %738 = vmatpush.msra.mxu0 0.0
          %739 = vmatpush.msra.mxu0 0.0
          %740 = vmatpush.msra.mxu0 0.0
          %741 = vmatpush.msra.mxu0 0.0
          %742 = vmatpush.msra.mxu0 0.0
          %743 = vmatpush.msra.mxu0 0.0
          %744 = vmatpush.msra.mxu0 %v465
          %745 = vmatmul.f32.gmra.mxu0 %v727
          %v746 = vpop.f32.mrf.mxu0
          %v747 = vadd.f32 0.0, %v746
          %748 = vdwg.mxu0
          %v750 = vsel %vm411, %v644, 0
          %752 = vmatpush.msra.mxu0 0.0
          %753 = vmatpush.msra.mxu0 0.0
          %754 = vmatpush.msra.mxu0 0.0
          %755 = vmatpush.msra.mxu0 0.0
          %756 = vmatpush.msra.mxu0 0.0
          %757 = vmatpush.msra.mxu0 0.0
          %758 = vmatpush.msra.mxu0 0.0
          %759 = vmatpush.msra.mxu0 0.0
          %760 = vmatpush.msra.mxu0 0.0
          %761 = vmatpush.msra.mxu0 0.0
          %762 = vmatpush.msra.mxu0 0.0
          %763 = vmatpush.msra.mxu0 0.0
          %764 = vmatpush.msra.mxu0 0.0
          %765 = vmatpush.msra.mxu0 0.0
          %766 = vmatpush.msra.mxu0 0.0
          %767 = vmatpush.msra.mxu0 %v466
          %768 = vmatmul.f32.gmra.mxu0 %v750
          %v769 = vpop.f32.mrf.mxu0
          %v770 = vadd.f32 0.0, %v769
          %771 = vdwg.mxu0
          %v773 = vsel %vm411, %v646, 0
          %775 = vmatpush.msra.mxu0 0.0
          %776 = vmatpush.msra.mxu0 0.0
          %777 = vmatpush.msra.mxu0 0.0
          %778 = vmatpush.msra.mxu0 0.0
          %779 = vmatpush.msra.mxu0 0.0
          %780 = vmatpush.msra.mxu0 0.0
          %781 = vmatpush.msra.mxu0 0.0
          %782 = vmatpush.msra.mxu0 0.0
          %783 = vmatpush.msra.mxu0 0.0
          %784 = vmatpush.msra.mxu0 0.0
          %785 = vmatpush.msra.mxu0 0.0
          %786 = vmatpush.msra.mxu0 0.0
          %787 = vmatpush.msra.mxu0 0.0
          %788 = vmatpush.msra.mxu0 0.0
          %789 = vmatpush.msra.mxu0 0.0
          %790 = vmatpush.msra.mxu0 %v467
          %791 = vmatmul.f32.gmra.mxu0 %v773
          %v792 = vpop.f32.mrf.mxu0
          %v793 = vadd.f32 0.0, %v792
          %794 = vdwg.mxu0
          %v795 = vadd.f32 %v699, %v724
          %v796 = vadd.f32 %v700, %v747
          %v797 = vadd.f32 %v701, %v770
          %v798 = vadd.f32 %v702, %v793
          %799 = vst.msk [vmem:[#allocation7] sm:$0xff] %vm411, %v795
          %800 = vst.msk [vmem:[#allocation7 + $0x8] sm:$0xff] %vm411, %v796
          %801 = vst.msk [vmem:[#allocation7 + $0x10] sm:$0xff] %vm411, %v797
          %802 = vst.msk [vmem:[#allocation7 + $0x18] sm:$0xff] %vm411, %v798
          %803 = vst.msk [vmem:[#allocation5] sm:$0xff] %vm433, %v599
          %804 = vst.msk [vmem:[#allocation5 + $0x8] sm:$0xff] %vm433, %v600
          %805 = vst.msk [vmem:[#allocation5 + $0x10] sm:$0xff] %vm433, %v601
          %806 = vst.msk [vmem:[#allocation5 + $0x18] sm:$0xff] %vm433, %v602
        $region65: #{tpu_custom_call.1} parent=39 // loop_footer
          %s454 = sadd.s32 %s452, 1
        $region66: #{tpu_custom_call.1} parent=39 // loop_footer_branch
          %451 = sbr.rel target = $region62
        $region67: #{tpu_custom_call.1} parent=39 // loop_exit
          _
        %v807 = vld [vmem:[#allocation7] sm:$0xff]
        %v808 = vld [vmem:[#allocation7 + $0x8] sm:$0xff]
        %v809 = vld [vmem:[#allocation7 + $0x10] sm:$0xff]
        %v810 = vld [vmem:[#allocation7 + $0x18] sm:$0xff]
        %v811 = vld [vmem:[#allocation6] sm:$0xff]
        %v812 = vld [vmem:[#allocation6 + $0x8] sm:$0xff]
        %v813 = vld [vmem:[#allocation6 + $0x10] sm:$0xff]
        %v814 = vld [vmem:[#allocation6 + $0x18] sm:$0xff]
        %v815 = vrcp.pop %v811
        %v816 = vrcp.pop %v812
        %v817 = vrcp.pop %v813
        %v818 = vrcp.pop %v814
        %820 = vset.pattern.permute.xlu0 0
        %821 = vperm.xlu0 %820, %v815
        %v822 = vpop.permute.xlu0 %821
        %825 = vset.pattern.permute.xlu0 0
        %826 = vperm.xlu0 %825, %v816
        %v827 = vpop.permute.xlu0 %826
        %830 = vset.pattern.permute.xlu0 0
        %831 = vperm.xlu0 %830, %v817
        %v832 = vpop.permute.xlu0 %831
        %835 = vset.pattern.permute.xlu0 0
        %836 = vperm.xlu0 %835, %v818
        %v837 = vpop.permute.xlu0 %836
        %v839 = vmul.f32 %v807, %v822
        %v840 = vmul.f32 %v808, %v827
        %v841 = vmul.f32 %v809, %v832
        %v842 = vmul.f32 %v810, %v837
        %844 = vrot.lane.b32.xlu0 %v840, 8
        %v845 = vpop.permute.xlu0 %844
        %848 = vrot.lane.b32.xlu0 %v841, 16
        %v849 = vpop.permute.xlu0 %848
        %852 = vrot.lane.b32.xlu0 %v842, 24
        %v853 = vpop.permute.xlu0 %852
        %v855 = vsel %vm411, %v839, %v845
        %vm856 = vcmask 130048
        %v857 = vsel %vm856, %v855, %v849
        %vm858 = vcmask 195584
        %v859 = vsel %vm858, %v857, %v853
        %v860 = vld [vmem:[#allocation14] sm:$0xff]
        %v861 = vld [vmem:[#allocation14 + $0x8] sm:$0xff]
        %v862 = vld [vmem:[#allocation14 + $0x10] sm:$0xff]
        %v863 = vld [vmem:[#allocation14 + $0x18] sm:$0xff]
        %v864 = vld [vmem:[%s4] sm:$0x1]
        %v866 = vperm.slane %v864, 0
        %v869 = vsel %vm386, %v859, 0
        %871 = vmatpush.msra.mxu0 0.0
        %872 = vmatpush.msra.mxu0 0.0
        %873 = vmatpush.msra.mxu0 0.0
        %874 = vmatpush.msra.mxu0 0.0
        %875 = vmatpush.msra.mxu0 0.0
        %876 = vmatpush.msra.mxu0 0.0
        %877 = vmatpush.msra.mxu0 0.0
        %878 = vmatpush.msra.mxu0 0.0
        %879 = vmatpush.msra.mxu0 0.0
        %880 = vmatpush.msra.mxu0 0.0
        %881 = vmatpush.msra.mxu0 0.0
        %882 = vmatpush.msra.mxu0 0.0
        %883 = vmatpush.msra.mxu0 %v863
        %884 = vmatpush.msra.mxu0 %v862
        %885 = vmatpush.msra.mxu0 %v861
        %886 = vmatpush.msra.mxu0 %v860
        %887 = vmatmul.f32.gmra.mxu0 %v869
        %v888 = vpop.f32.mrf.mxu0
        %v889 = vadd.f32 %v866, %v888
        %890 = vdwg.mxu0
        %891 = vst.msk [vmem:[%s305] sm:$0xff] %vm386, %v889
        %s892 = sand.u32 %s156, 1
        %s893 = scalar_lea.sflag [#allocation10], %s892
        %s894 = sand.u32 %s156, 1
        %s895 = smul.addr %s894, 8
        %s896 = scalar_lea.vmem [#allocation16], %s895
        // Predicated region
        $region68: #{tpu_custom_call.1} parent=39 // pred_check
          %p897 = pneg %p166
        $region69: #{tpu_custom_call.1} parent=39 // pred_check_branch
          %899 = sbr.rel (%p897) target = $region71
        $region70: #{tpu_custom_call.1} parent=39 // pred_region
          %901 = vsyncadd %s893, 0
          %s902 = sadd.s32 %s29, %s28
          %s903 = smul.addr %s902, 8
          %s904 = scalar_lea.hbm %s5, %s903
          %s906 = sshll.u32 %s896, 4
          %s907 = int_to_ptr.vmem [resolvable:$true] %s906
          %s908 = sshll.u32 %s904, 4
          %s909 = int_to_ptr.hbm [resolvable:$true] %s908
          %911 = dma.vmem_to_hbm [thread:$0]  %s907, 128, %s909, %s893
        $region71: #{tpu_custom_call.1} parent=39 // pred_fallthru
          _
      $region40: #{tpu_custom_call.1} parent=5 // pred_fallthru
        _
      %p912 = scmp.le.s32.totalorder 2, %s19
      // Predicated region
      $region72: #{tpu_custom_call.1} parent=5 // pred_check
        %p913 = pneg %p912
      $region73: #{tpu_custom_call.1} parent=5 // pred_check_branch
        %915 = sbr.rel (%p913) target = $region75
      $region74: #{tpu_custom_call.1} parent=5 // pred_region
        %s916 = ssub.s32 %s19, 2
        // Predicated region
        $region76: #{tpu_custom_call.1} parent=74 // pred_check
          %p917 = pneg %p172
        $region77: #{tpu_custom_call.1} parent=74 // pred_check_branch
          %919 = sbr.rel (%p917) target = $region79
        $region78: #{tpu_custom_call.1} parent=74 // pred_region
          %s920 = sand.u32 %s157, 1
          %s921 = scalar_lea.sflag [#allocation10], %s920
          %s922 = sand.u32 %s157, 1
          %s923 = smul.addr %s922, 8
          %s924 = scalar_lea.vmem [#allocation16], %s923
          %926 = dma.done %s921, 128
        $region79: #{tpu_custom_call.1} parent=74 // pred_fallthru
          _
      $region75: #{tpu_custom_call.1} parent=5 // pred_fallthru
        _
    $region6: #{tpu_custom_call.1} parent=1 // loop_footer
      %s23 = sadd.s32 1, %s19
    $region7: #{tpu_custom_call.1} parent=1 // loop_footer_branch
      %18 = sbr.rel target = $region3
    $region8: #{tpu_custom_call.1} parent=1 // loop_exit
      _
    %927 = vsyncpa [#allocation9], 1
    %s928 = scalar_lea.sflag [#allocation9], 1
    %929 = vsyncpa %s928, 1
    %930 = vsyncpa [#allocation12], 1
    %931 = vsyncpa [#allocation15], 1
    %932 = vsyncpa [#allocation10], 1
    %s933 = scalar_lea.sflag [#allocation10], 1
    %934 = vsyncpa %s933, 1

</llo_original>
